<compile_context>
chip_gen: v7x
topology: tpu7x:2x2x1
jax: 0.10.0
libtpu: 0.0.40
codegen_flags: <defaults>
</compile_context>

<pallas_src>
import jax
import jax.numpy as jnp
from jax import lax
from jax.experimental import pallas as pl
from jax.experimental.pallas import tpu as pltpu


# ----------------------------------------------------------------------------
# small helpers
# ----------------------------------------------------------------------------
def _round_up(x, m):
    return (x + m - 1) // m * m


def _vmem_limit(block_bytes, temp_bytes=0):
    """Scoped-VMEM limit: 2x-headroom over double-buffered blocks + temps,
    never below the 32 MiB platform default, capped at 48 MiB (v7x-safe)."""
    est = 2 * (2 * block_bytes + temp_bytes) + (8 << 20)
    return int(min(48 << 20, max(32 << 20, est)))


def _pick_tile_n(n):
    # Full-Cout tiles keep stores lane-dense and load weights once (v5e/v6e);
    # Cout=512 splits in two so deep layers still expose >=2 grid steps (v7x).
    return n if n <= 256 else 256


# ----------------------------------------------------------------------------
# Stride-1 3x3 conv as shifted matmuls, one flattened image per grid step.
# The (HW, Cin) bf16 block is zero-padded inside the kernel (VMEM only); each
# tap is a static slice of that padded value, masked only for wcol wraps.
# ----------------------------------------------------------------------------
def _wmasks(HW, W):
    col = lax.broadcasted_iota(jnp.int32, (HW, 1), 0) % W
    return col >= 1, col <= W - 2


def _conv3x3_body(xv, w_ref, b_ref, W, relu, mw_m1, mw_p1):
    """3x3 'same' conv of one flattened image xv:(HW,Cin) bf16 against
    w_ref:(3, 3*Cin, tn) bf16; returns (HW, tn) f32 (+bias, optional ReLU)."""
    HW, Cin = xv.shape
    tn = w_ref.shape[-1]
    P = _round_up(W + 1, 16)                         # aligned halo pad
    zpad = jnp.zeros((P, Cin), xv.dtype)
    xpad = jnp.concatenate([zpad, xv, zpad], axis=0)  # zero rows absorb dy edges
    use_kconcat = (Cin % 128 == 0)                   # lane-aligned K-concat only
    acc = jnp.zeros((HW, tn), jnp.float32)
    for r, dy in enumerate((-1, 0, 1)):
        parts = []
        for dx in (-1, 0, 1):
            off = P + dy * W + dx                    # static slice offset
            p = xpad[off:off + HW, :]
            if dx == -1:
                p = jnp.where(mw_m1, p, 0)
            elif dx == 1:
                p = jnp.where(mw_p1, p, 0)
            parts.append(p)
        if use_kconcat:
            slab = jnp.concatenate(parts, axis=-1)   # (HW, 3*Cin)
            acc = acc + jnp.dot(slab, w_ref[r],
                                preferred_element_type=jnp.float32)
        else:
            wv = w_ref[r]                            # (3*Cin, tn)
            for c in range(3):
                acc = acc + jnp.dot(parts[c], wv[c * Cin:(c + 1) * Cin, :],
                                    preferred_element_type=jnp.float32)
    acc = acc + b_ref[...]
    if relu:
        acc = jnp.maximum(acc, 0.0)
    return acc


def _fold_w3x3(w_hwio, scale):
    w = w_hwio if scale is None else w_hwio * scale  # fold BN scale
    kh, kw, cin, cout = w.shape
    return w.reshape(kh, kw * cin, cout).astype(jnp.bfloat16)


def _make_conv3x3_kernel(W, HW, relu, has_res):
    def kernel(x_ref, w_ref, b_ref, *rest):
        if has_res:
            r_ref, o_ref = rest
        else:
            (o_ref,) = rest
        mw_m1, mw_p1 = _wmasks(HW, W)
        acc = _conv3x3_body(x_ref[...], w_ref, b_ref, W, False, mw_m1, mw_p1)
        if has_res:
            acc = acc + r_ref[...].astype(jnp.float32)
        if relu:
            acc = jnp.maximum(acc, 0.0)
        o_ref[...] = acc.astype(o_ref.dtype)
    return kernel


def conv3x3_s1(x, w_hwio, scale, bias, relu=True, residual=None):
    B, H, W, Cin = x.shape
    Cout = w_hwio.shape[-1]
    HW = H * W
    tile_n = _pick_tile_n(Cout)
    n_n = Cout // tile_n

    wf = _fold_w3x3(w_hwio, scale)                        # (3, 3*Cin, Cout) bf16
    bias2 = bias.reshape(1, Cout).astype(jnp.float32)
    xf = x.reshape(B * HW, Cin).astype(jnp.bfloat16)

    args = [xf, wf, bias2]
    in_specs = [
        pl.BlockSpec((HW, Cin), lambda b, j: (b, 0)),
        pl.BlockSpec((3, 3 * Cin, tile_n), lambda b, j: (0, 0, j)),
        pl.BlockSpec((1, tile_n), lambda b, j: (0, j)),
    ]
    has_res = residual is not None
    if has_res:
        args.append(residual.reshape(B * HW, Cout).astype(jnp.bfloat16))
        in_specs.append(pl.BlockSpec((HW, tile_n), lambda b, j: (b, j)))

    block_bytes = (HW * Cin * 2 + 9 * Cin * tile_n * 2 + tile_n * 4
                   + HW * tile_n * 2 * (2 if has_res else 1))
    temp_bytes = HW * (12 * Cin + 4 * tile_n)
    out = pl.pallas_call(
        _make_conv3x3_kernel(W, HW, relu, has_res),
        out_shape=jax.ShapeDtypeStruct((B * HW, Cout), jnp.bfloat16),
        grid=(B, n_n),
        in_specs=in_specs,
        out_specs=pl.BlockSpec((HW, tile_n), lambda b, j: (b, j)),
        compiler_params=pltpu.CompilerParams(
            dimension_semantics=("parallel", "parallel"),
            vmem_limit_bytes=_vmem_limit(block_bytes, temp_bytes)),
    )(*args)
    return out.reshape(B, H, W, Cout)


# ----------------------------------------------------------------------------
# Fused BasicBlock (stride-1, no downsample):
#   out = relu(conv2(relu(conv1(x))) + x)   in a single pallas_call,
# with the intermediate activation held in VMEM.
# ----------------------------------------------------------------------------
def _make_block_kernel(W, HW):
    def kernel(x_ref, w1_ref, b1_ref, w2_ref, b2_ref, o_ref):
        mw_m1, mw_p1 = _wmasks(HW, W)
        xv = x_ref[...]
        h = _conv3x3_body(xv, w1_ref, b1_ref, W, True, mw_m1, mw_p1)
        h = h.astype(jnp.bfloat16)                   # stays in VMEM
        acc = _conv3x3_body(h, w2_ref, b2_ref, W, False, mw_m1, mw_p1)
        acc = acc + xv.astype(jnp.float32)           # identity residual
        acc = jnp.maximum(acc, 0.0)
        o_ref[...] = acc.astype(o_ref.dtype)
    return kernel


def fused_basic_block(x, blk):
    B, H, W, C = x.shape
    HW = H * W
    w1 = _fold_w3x3(blk['conv1_w'], blk['bn1'][0])
    b1 = blk['bn1'][1].reshape(1, C).astype(jnp.float32)
    w2 = _fold_w3x3(blk['conv2_w'], blk['bn2'][0])
    b2 = blk['bn2'][1].reshape(1, C).astype(jnp.float32)
    xf = x.reshape(B * HW, C).astype(jnp.bfloat16)

    block_bytes = 2 * HW * C * 2 + 2 * 9 * C * C * 2 + 2 * C * 4
    temp_bytes = HW * 20 * C
    out = pl.pallas_call(
        _make_block_kernel(W, HW),
        out_shape=jax.ShapeDtypeStruct((B * HW, C), jnp.bfloat16),
        grid=(B,),
        in_specs=[
            pl.BlockSpec((HW, C), lambda b: (b, 0)),
            pl.BlockSpec((3, 3 * C, C), lambda b: (0, 0, 0)),
            pl.BlockSpec((1, C), lambda b: (0, 0)),
            pl.BlockSpec((3, 3 * C, C), lambda b: (0, 0, 0)),
            pl.BlockSpec((1, C), lambda b: (0, 0)),
        ],
        out_specs=pl.BlockSpec((HW, C), lambda b: (b, 0)),
        compiler_params=pltpu.CompilerParams(
            dimension_semantics=("parallel",),
            vmem_limit_bytes=_vmem_limit(block_bytes, temp_bytes)),
    )(xf, w1, b1, w2, b2)
    return out.reshape(B, H, W, C)


# ----------------------------------------------------------------------------
# Fused  out = act(A @ W + bias)  (bf16 operands, f32 accumulate) for the 7x7
# stem, stride-2 3x3, 1x1 downsample and 1x1 head convolutions (im2col path).
# ----------------------------------------------------------------------------
def _make_matmul_kernel(relu):
    def kernel(a_ref, w_ref, b_ref, o_ref):
        acc = jnp.dot(a_ref[...], w_ref[...], preferred_element_type=jnp.float32)
        acc = acc + b_ref[...]
        if relu:
            acc = jnp.maximum(acc, 0.0)
        o_ref[...] = acc.astype(o_ref.dtype)
    return kernel


def matmul_bias_act(a, w, bias, relu=True, out_dtype=jnp.bfloat16):
    M, K = a.shape
    K2, N = w.shape
    assert K == K2
    tile_n = _pick_tile_n(N)
    tile_m = min(512, _round_up(M, 8))
    if M >= 16 and -(-M // tile_m) < 2:      # guarantee >=2 M-steps (v7x megacore)
        tile_m = _round_up((M + 1) // 2, 8)
    Mp = _round_up(M, tile_m)
    Kp = _round_up(K, 16)

    a = a.astype(jnp.bfloat16)
    wb = w.astype(jnp.bfloat16)
    if Kp != K:
        a = jnp.pad(a, ((0, 0), (0, Kp - K)))
        wb = jnp.pad(wb, ((0, Kp - K), (0, 0)))
    if Mp != M:
        a = jnp.pad(a, ((0, Mp - M), (0, 0)))
    bias2 = bias.reshape(1, N).astype(jnp.float32)

    block_bytes = (tile_m * Kp * 2 + Kp * tile_n * 2 + tile_n * 4
                   + tile_m * tile_n * jnp.dtype(out_dtype).itemsize)
    temp_bytes = 2 * tile_m * tile_n * 4
    out = pl.pallas_call(
        _make_matmul_kernel(relu),
        out_shape=jax.ShapeDtypeStruct((Mp, N), out_dtype),
        grid=(Mp // tile_m, N // tile_n),
        in_specs=[pl.BlockSpec((tile_m, Kp), lambda i, j: (i, 0)),
                  pl.BlockSpec((Kp, tile_n), lambda i, j: (0, j)),
                  pl.BlockSpec((1, tile_n), lambda i, j: (0, j))],
        out_specs=pl.BlockSpec((tile_m, tile_n), lambda i, j: (i, j)),
        compiler_params=pltpu.CompilerParams(
            dimension_semantics=("parallel", "parallel"),
            vmem_limit_bytes=_vmem_limit(block_bytes, temp_bytes)),
    )(a, wb, bias2)
    return out[:M] if Mp != M else out


def _im2col(x, kh, kw, stride, padding):
    B, H, W, C = x.shape
    xp = jnp.pad(x, ((0, 0), (padding, padding), (padding, padding), (0, 0)))
    Ho = (H + 2 * padding - kh) // stride + 1
    Wo = (W + 2 * padding - kw) // stride + 1
    cols = []
    for i in range(kh):
        for j in range(kw):
            cols.append(xp[:, i:i + (Ho - 1) * stride + 1:stride,
                            j:j + (Wo - 1) * stride + 1:stride, :])
    cols = jnp.concatenate(cols, axis=-1)                 # (B, Ho, Wo, kh*kw*C)
    return cols.reshape(B * Ho * Wo, kh * kw * C), (B, Ho, Wo)


def conv_bn_act(x, w_hwio, scale, bias, stride=1, padding=0, relu=True,
                out_dtype=jnp.bfloat16):
    kh, kw, cin, cout = w_hwio.shape
    if kh == 3 and kw == 3 and stride == 1 and padding == 1:
        return conv3x3_s1(x, w_hwio, scale, bias, relu=relu)
    w = w_hwio if scale is None else w_hwio * scale       # fold BN scale
    w2 = w.reshape(kh * kw * cin, cout)
    cols, (B, Ho, Wo) = _im2col(x.astype(jnp.bfloat16), kh, kw, stride, padding)
    out = matmul_bias_act(cols, w2, bias, relu=relu, out_dtype=out_dtype)
    return out.reshape(B, Ho, Wo, cout)


# ----------------------------------------------------------------------------
# Deterministic synthetic parameters (shapes follow torchvision ResNet-18)
# ----------------------------------------------------------------------------
def _bn_params(key, c, eps=1e-5):
    k1, k2, k3, k4 = jax.random.split(key, 4)
    gamma = 1.0 + 0.1 * jax.random.normal(k1, (c,), jnp.float32)
    beta = 0.1 * jax.random.normal(k2, (c,), jnp.float32)
    mean = 0.1 * jax.random.normal(k3, (c,), jnp.float32)
    var = 1.0 + 0.1 * jax.random.uniform(k4, (c,), jnp.float32)
    scale = gamma / jnp.sqrt(var + eps)
    bias = beta - mean * scale
    return scale, bias


def _conv_w(key, kh, kw, cin, cout):
    fan_in = kh * kw * cin
    return jax.random.normal(key, (kh, kw, cin, cout), jnp.float32) * (2.0 / fan_in) ** 0.5


def init_params(key, model_dim=64, pos_hw=(8, 8)):
    keys = iter(jax.random.split(key, 128))
    params = {'conv1_w': _conv_w(next(keys), 7, 7, 1, 64),   # stem conv, C_in=1
              'bn1': _bn_params(next(keys), 64)}

    layer_cfg = [(64, 64, 1), (64, 128, 2), (128, 256, 2), (256, 512, 2)]
    blocks = []
    for (cin, cout, stride) in layer_cfg:
        layer = []
        for b in range(2):
            s = stride if b == 0 else 1
            cb_in = cin if b == 0 else cout
            blk = {'conv1_w': _conv_w(next(keys), 3, 3, cb_in, cout),
                   'bn1': _bn_params(next(keys), cout),
                   'conv2_w': _conv_w(next(keys), 3, 3, cout, cout),
                   'bn2': _bn_params(next(keys), cout)}
            if s != 1 or cb_in != cout:
                blk['down_w'] = _conv_w(next(keys), 1, 1, cb_in, cout)
                blk['down_bn'] = _bn_params(next(keys), cout)
            layer.append(blk)
        blocks.append(layer)
    params['blocks'] = blocks

    params['head_w'] = _conv_w(next(keys), 1, 1, 512, model_dim)   # 1x1 conv, bias=True
    params['head_b'] = 0.01 * jax.random.normal(next(keys), (model_dim,), jnp.float32)

    H, W = pos_hw
    params['row_embed'] = jax.random.uniform(next(keys), (H, model_dim // 2), jnp.float32)
    params['col_embed'] = jax.random.uniform(next(keys), (W, model_dim // 2), jnp.float32)
    return params


# ----------------------------------------------------------------------------
# Forward pass (EncoderUSCities.forward)
# ----------------------------------------------------------------------------
def basic_block(x, blk, stride):
    if stride == 1 and 'down_w' not in blk:
        return fused_basic_block(x, blk)          # one kernel, VMEM intermediate
    out = conv_bn_act(x, blk['conv1_w'], *blk['bn1'],
                      stride=stride, padding=1, relu=True)
    identity = conv_bn_act(x, blk['down_w'], *blk['down_bn'],
                           stride=stride, padding=0, relu=False)
    return conv3x3_s1(out, blk['conv2_w'], *blk['bn2'], relu=True,
                      residual=identity)


def encoder_uscities_forward(params, x_nchw):
    # NCHW -> NHWC, bf16 activations between layers
    x = jnp.transpose(x_nchw, (0, 2, 3, 1)).astype(jnp.bfloat16)

    # truncated ResNet-18 stem (no maxpool, exactly as in troncated_resnet)
    x = conv_bn_act(x, params['conv1_w'], *params['bn1'],
                    stride=2, padding=3, relu=True)
    for li, layer in enumerate(params['blocks']):
        for bi, blk in enumerate(layer):
            stride = 2 if (li > 0 and bi == 0) else 1
            x = basic_block(x, blk, stride)

    # Sequential(..., nn.ReLU(), Conv2d(512, model_dim, 1)).  The last
    # BasicBlock already ends in ReLU, so the extra ReLU is idempotent.
    x = conv_bn_act(x, params['head_w'], None, params['head_b'],
                    stride=1, padding=0, relu=False, out_dtype=jnp.float32)

    B, H, W, C = x.shape
    # Learned positional encodings: cat(row, col) along channel, broadcast.
    row = params['row_embed']                                   # (H, C//2)
    col = params['col_embed']                                   # (W, C//2)
    pos = jnp.concatenate([
        jnp.broadcast_to(row[:, None, :], (H, W, C // 2)),
        jnp.broadcast_to(col[None, :, :], (H, W, C // 2)),
    ], axis=-1)                                                 # (H, W, C)
    pos_embed = jnp.broadcast_to(pos.reshape(1, H * W, C), (B, H * W, C))

    # flatten(start_dim=2) + transpose(1, 2)  ==  NHWC reshape to (B, H*W, C)
    x_seq = x.reshape(B, H * W, C)
    mask = None
    return x_seq, mask, pos_embed


# ----------------------------------------------------------------------------
# Small numerical self-tests of the new conv kernels (bf16 tolerance).
# ----------------------------------------------------------------------------
def _conv3x3_ref(x, w, scale, bias, relu=True, residual=None):
    wq = (w * scale).astype(jnp.bfloat16).astype(jnp.float32)
    xq = x.astype(jnp.bfloat16).astype(jnp.float32)
    y = lax.conv_general_dilated(xq, wq, (1, 1), ((1, 1), (1, 1)),
                                 dimension_numbers=('NHWC', 'HWIO', 'NHWC'),
                                 precision=lax.Precision.HIGHEST)
    y = y + bias
    if residual is not None:
        y = y + residual.astype(jnp.bfloat16).astype(jnp.float32)
    if relu:
        y = jnp.maximum(y, 0.0)
    return y


def _self_test():
    ks = jax.random.split(jax.random.PRNGKey(42), 8)
    sc = 1.0 + 0.1 * jax.random.normal(ks[2], (128,), jnp.float32)
    bi = 0.1 * jax.random.normal(ks[3], (128,), jnp.float32)

    # (1) Cin=64 path (per-tap matmuls) + residual + ReLU
    x = jax.random.normal(ks[0], (2, 8, 8, 64), jnp.float32)
    w = 0.1 * jax.random.normal(ks[1], (3, 3, 64, 128), jnp.float32)
    res = jax.random.normal(ks[4], (2, 8, 8, 128), jnp.float32)
    got = conv3x3_s1(x, w, sc, bi, relu=True, residual=res).astype(jnp.float32)
    want = _conv3x3_ref(x, w, sc, bi, relu=True, residual=res)
    assert bool(jnp.allclose(got, want, rtol=5e-2, atol=5e-2)), "conv3x3 (per-tap) mismatch"

    # (2) Cin=128 path (lane-aligned K-concat), no residual, no ReLU
    x2 = jax.random.normal(ks[5], (2, 8, 8, 128), jnp.float32)
    w2 = 0.05 * jax.random.normal(ks[6], (3, 3, 128, 128), jnp.float32)
    got2 = conv3x3_s1(x2, w2, sc, bi, relu=False).astype(jnp.float32)
    want2 = _conv3x3_ref(x2, w2, sc, bi, relu=False)
    assert bool(jnp.allclose(got2, want2, rtol=5e-2, atol=5e-2)), "conv3x3 (k-concat) mismatch"

    # (3) fused BasicBlock
    w3 = 0.05 * jax.random.normal(ks[7], (3, 3, 128, 128), jnp.float32)
    blk = {'conv1_w': w2, 'bn1': (sc, bi), 'conv2_w': w3, 'bn2': (sc, bi)}
    got3 = fused_basic_block(x2, blk).astype(jnp.float32)
    h = _conv3x3_ref(x2, w2, sc, bi, relu=True)
    h = h.astype(jnp.bfloat16).astype(jnp.float32)
    want3 = _conv3x3_ref(h, w3, sc, bi, relu=False) \
        + x2.astype(jnp.bfloat16).astype(jnp.float32)
    want3 = jnp.maximum(want3, 0.0)
    assert bool(jnp.allclose(got3, want3, rtol=5e-2, atol=5e-2)), "fused block mismatch"


if __name__ == "__main__":
    _self_test()

    model_dim = 64
    B = 2
    key = jax.random.PRNGKey(0)
    k_param, k_input = jax.random.split(key)

    # module fixes input_shape = (1, 128, 128); CNN output is (B, 64, 8, 8)
    params = init_params(k_param, model_dim=model_dim, pos_hw=(8, 8))
    x = jax.random.normal(k_input, (B, 1, 128, 128), jnp.float32)

    fwd = jax.jit(encoder_uscities_forward)
    x_seq, mask, pos_embed = fwd(params, x)
    jax.block_until_ready(x_seq)
    jax.block_until_ready(pos_embed)

    assert x_seq.shape == (B, 64, model_dim), x_seq.shape
    assert pos_embed.shape == (B, 64, model_dim), pos_embed.shape
    assert mask is None
    assert bool(jnp.all(jnp.isfinite(x_seq)))
    print("KERNEL_OK")
</pallas_src>

<mosaic_0001>
module attributes {stable_mosaic.version = 11 : i64} {
  func.func @kernel(%arg0: i32, %arg1: i32, %arg2: memref<64x64xbf16, #tpu.memory_space<vmem>>, %arg3: memref<3x192x128xbf16, #tpu.memory_space<vmem>>, %arg4: memref<1x128xf32, #tpu.memory_space<vmem>>, %arg5: memref<64x128xbf16, #tpu.memory_space<vmem>>, %arg6: memref<64x128xbf16, #tpu.memory_space<vmem>>) attributes {dimension_semantics = [#tpu.dimension_semantics<parallel>, #tpu.dimension_semantics<parallel>], iteration_bounds = array<i64: 2, 1>, scalar_prefetch = 0 : i64, scratch_operands = 0 : i64, tpu.core_type = #tpu.core_type<tc>, window_params = [{transform_indices = @transform_0, window_bounds = array<i64: 64, 64>}, {transform_indices = @transform_1, window_bounds = array<i64: 3, 192, 128>}, {transform_indices = @transform_2, window_bounds = array<i64: 1, 128>}, {transform_indices = @transform_3, window_bounds = array<i64: 64, 128>}, {transform_indices = @transform_4, window_bounds = array<i64: 64, 128>}]} {
    %0 = tpu.iota {dimensions = array<i32: 0>} : vector<64x1xi32>
    %c8_i32 = arith.constant 8 : i32
    %c0_i32 = arith.constant 0 : i32
    %1 = arith.cmpi eq, %c8_i32, %c0_i32 : i32
    %c1_i32 = arith.constant 1 : i32
    %2 = arith.select %1, %c1_i32, %c8_i32 : i32
    %3 = vector.broadcast %2 : i32 to vector<64x1xi32>
    %4 = arith.remsi %0, %3 : vector<64x1xi32>
    %c0_i32_0 = arith.constant 0 : i32
    %5 = vector.broadcast %c0_i32_0 : i32 to vector<64x1xi32>
    %6 = arith.cmpi ne, %4, %5 : vector<64x1xi32>
    %c0_i32_1 = arith.constant 0 : i32
    %7 = vector.broadcast %c0_i32_1 : i32 to vector<64x1xi32>
    %8 = arith.cmpi slt, %4, %7 : vector<64x1xi32>
    %c0_i32_2 = arith.constant 0 : i32
    %9 = arith.cmpi slt, %2, %c0_i32_2 : i32
    %10 = vector.broadcast %9 : i1 to vector<64x1xi1>
    %11 = vector.broadcast %10 : vector<64x1xi1> to vector<64x1xi1>
    %12 = arith.xori %8, %11 : vector<64x1xi1>
    %13 = arith.andi %12, %6 : vector<64x1xi1>
    %14 = vector.broadcast %2 : i32 to vector<64x1xi32>
    %15 = arith.addi %4, %14 : vector<64x1xi32>
    %16 = arith.select %13, %15, %4 : vector<64x1xi1>, vector<64x1xi32>
    %c1_i32_3 = arith.constant 1 : i32
    %17 = vector.broadcast %c1_i32_3 : i32 to vector<64x1xi32>
    %18 = arith.cmpi sge, %16, %17 : vector<64x1xi32>
    %c6_i32 = arith.constant 6 : i32
    %19 = vector.broadcast %c6_i32 : i32 to vector<64x1xi32>
    %20 = arith.cmpi sle, %16, %19 : vector<64x1xi32>
    %c0 = arith.constant 0 : index
    %c0_4 = arith.constant 0 : index
    %21 = vector.load %arg2[%c0, %c0_4] : memref<64x64xbf16, #tpu.memory_space<vmem>>, vector<64x64xbf16>
    %cst = arith.constant 0.000000e+00 : bf16
    %22 = vector.broadcast %cst : bf16 to vector<16x64xbf16>
    %23 = tpu.concatenate %22, %21, %22 in 0 : vector<16x64xbf16>, vector<64x64xbf16>, vector<16x64xbf16> -> vector<96x64xbf16>
    %cst_5 = arith.constant 0.000000e+00 : f32
    %24 = vector.broadcast %cst_5 : f32 to vector<64x128xf32>
    %25 = vector.extract_strided_slice %23 {offsets = [7, 0], sizes = [64, 64], strides = [1, 1]} : vector<96x64xbf16> to vector<64x64xbf16>
    %c0_i32_6 = arith.constant 0 : i32
    %26 = arith.sitofp %c0_i32_6 : i32 to bf16
    %27 = vector.shape_cast %18 : vector<64x1xi1> to vector<64x1xi1>
    %28 = vector.broadcast %27 : vector<64x1xi1> to vector<64x64xi1>
    %29 = vector.broadcast %26 : bf16 to vector<64x64xbf16>
    %30 = arith.select %28, %25, %29 : vector<64x64xi1>, vector<64x64xbf16>
    %31 = vector.extract_strided_slice %23 {offsets = [8, 0], sizes = [64, 64], strides = [1, 1]} : vector<96x64xbf16> to vector<64x64xbf16>
    %32 = vector.extract_strided_slice %23 {offsets = [9, 0], sizes = [64, 64], strides = [1, 1]} : vector<96x64xbf16> to vector<64x64xbf16>
    %c0_i32_7 = arith.constant 0 : i32
    %33 = arith.sitofp %c0_i32_7 : i32 to bf16
    %34 = vector.shape_cast %20 : vector<64x1xi1> to vector<64x1xi1>
    %35 = vector.broadcast %34 : vector<64x1xi1> to vector<64x64xi1>
    %36 = vector.broadcast %33 : bf16 to vector<64x64xbf16>
    %37 = arith.select %35, %32, %36 : vector<64x64xi1>, vector<64x64xbf16>
    %c0_8 = arith.constant 0 : index
    %c0_9 = arith.constant 0 : index
    %c0_10 = arith.constant 0 : index
    %38 = vector.load %arg3[%c0_8, %c0_9, %c0_10] : memref<3x192x128xbf16, #tpu.memory_space<vmem>>, vector<1x192x128xbf16>
    %39 = vector.shape_cast %38 : vector<1x192x128xbf16> to vector<192x128xbf16>
    %40 = vector.extract_strided_slice %39 {offsets = [0, 0], sizes = [64, 128], strides = [1, 1]} : vector<192x128xbf16> to vector<64x128xbf16>
    %cst_11 = arith.constant dense<0.000000e+00> : vector<64x128xf32>
    %41 = tpu.matmul %30, %40, %cst_11 {dimension_numbers = #tpu.dot_dimension_numbers<[1], [0], [0], [1], [0, 0, 1, 1], [], []>} : vector<64x64xbf16>, vector<64x128xbf16>, vector<64x128xf32> -> vector<64x128xf32>
    %42 = arith.addf %24, %41 : vector<64x128xf32>
    %43 = vector.extract_strided_slice %39 {offsets = [64, 0], sizes = [64, 128], strides = [1, 1]} : vector<192x128xbf16> to vector<64x128xbf16>
    %cst_12 = arith.constant dense<0.000000e+00> : vector<64x128xf32>
    %44 = tpu.matmul %31, %43, %cst_12 {dimension_numbers = #tpu.dot_dimension_numbers<[1], [0], [0], [1], [0, 0, 1, 1], [], []>} : vector<64x64xbf16>, vector<64x128xbf16>, vector<64x128xf32> -> vector<64x128xf32>
    %45 = arith.addf %42, %44 : vector<64x128xf32>
    %46 = vector.extract_strided_slice %39 {offsets = [128, 0], sizes = [64, 128], strides = [1, 1]} : vector<192x128xbf16> to vector<64x128xbf16>
    %cst_13 = arith.constant dense<0.000000e+00> : vector<64x128xf32>
    %47 = tpu.matmul %37, %46, %cst_13 {dimension_numbers = #tpu.dot_dimension_numbers<[1], [0], [0], [1], [0, 0, 1, 1], [], []>} : vector<64x64xbf16>, vector<64x128xbf16>, vector<64x128xf32> -> vector<64x128xf32>
    %48 = arith.addf %45, %47 : vector<64x128xf32>
    %49 = vector.extract_strided_slice %23 {offsets = [15, 0], sizes = [64, 64], strides = [1, 1]} : vector<96x64xbf16> to vector<64x64xbf16>
    %c0_i32_14 = arith.constant 0 : i32
    %50 = arith.sitofp %c0_i32_14 : i32 to bf16
    %51 = vector.shape_cast %18 : vector<64x1xi1> to vector<64x1xi1>
    %52 = vector.broadcast %51 : vector<64x1xi1> to vector<64x64xi1>
    %53 = vector.broadcast %50 : bf16 to vector<64x64xbf16>
    %54 = arith.select %52, %49, %53 : vector<64x64xi1>, vector<64x64xbf16>
    %55 = vector.extract_strided_slice %23 {offsets = [16, 0], sizes = [64, 64], strides = [1, 1]} : vector<96x64xbf16> to vector<64x64xbf16>
    %56 = vector.extract_strided_slice %23 {offsets = [17, 0], sizes = [64, 64], strides = [1, 1]} : vector<96x64xbf16> to vector<64x64xbf16>
    %c0_i32_15 = arith.constant 0 : i32
    %57 = arith.sitofp %c0_i32_15 : i32 to bf16
    %58 = vector.shape_cast %20 : vector<64x1xi1> to vector<64x1xi1>
    %59 = vector.broadcast %58 : vector<64x1xi1> to vector<64x64xi1>
    %60 = vector.broadcast %57 : bf16 to vector<64x64xbf16>
    %61 = arith.select %59, %56, %60 : vector<64x64xi1>, vector<64x64xbf16>
    %c1 = arith.constant 1 : index
    %c0_16 = arith.constant 0 : index
    %c0_17 = arith.constant 0 : index
    %62 = vector.load %arg3[%c1, %c0_16, %c0_17] : memref<3x192x128xbf16, #tpu.memory_space<vmem>>, vector<1x192x128xbf16>
    %63 = vector.shape_cast %62 : vector<1x192x128xbf16> to vector<192x128xbf16>
    %64 = vector.extract_strided_slice %63 {offsets = [0, 0], sizes = [64, 128], strides = [1, 1]} : vector<192x128xbf16> to vector<64x128xbf16>
    %cst_18 = arith.constant dense<0.000000e+00> : vector<64x128xf32>
    %65 = tpu.matmul %54, %64, %cst_18 {dimension_numbers = #tpu.dot_dimension_numbers<[1], [0], [0], [1], [0, 0, 1, 1], [], []>} : vector<64x64xbf16>, vector<64x128xbf16>, vector<64x128xf32> -> vector<64x128xf32>
    %66 = arith.addf %48, %65 : vector<64x128xf32>
    %67 = vector.extract_strided_slice %63 {offsets = [64, 0], sizes = [64, 128], strides = [1, 1]} : vector<192x128xbf16> to vector<64x128xbf16>
    %cst_19 = arith.constant dense<0.000000e+00> : vector<64x128xf32>
    %68 = tpu.matmul %55, %67, %cst_19 {dimension_numbers = #tpu.dot_dimension_numbers<[1], [0], [0], [1], [0, 0, 1, 1], [], []>} : vector<64x64xbf16>, vector<64x128xbf16>, vector<64x128xf32> -> vector<64x128xf32>
    %69 = arith.addf %66, %68 : vector<64x128xf32>
    %70 = vector.extract_strided_slice %63 {offsets = [128, 0], sizes = [64, 128], strides = [1, 1]} : vector<192x128xbf16> to vector<64x128xbf16>
    %cst_20 = arith.constant dense<0.000000e+00> : vector<64x128xf32>
    %71 = tpu.matmul %61, %70, %cst_20 {dimension_numbers = #tpu.dot_dimension_numbers<[1], [0], [0], [1], [0, 0, 1, 1], [], []>} : vector<64x64xbf16>, vector<64x128xbf16>, vector<64x128xf32> -> vector<64x128xf32>
    %72 = arith.addf %69, %71 : vector<64x128xf32>
    %73 = vector.extract_strided_slice %23 {offsets = [23, 0], sizes = [64, 64], strides = [1, 1]} : vector<96x64xbf16> to vector<64x64xbf16>
    %c0_i32_21 = arith.constant 0 : i32
    %74 = arith.sitofp %c0_i32_21 : i32 to bf16
    %75 = vector.shape_cast %18 : vector<64x1xi1> to vector<64x1xi1>
    %76 = vector.broadcast %75 : vector<64x1xi1> to vector<64x64xi1>
    %77 = vector.broadcast %74 : bf16 to vector<64x64xbf16>
    %78 = arith.select %76, %73, %77 : vector<64x64xi1>, vector<64x64xbf16>
    %79 = vector.extract_strided_slice %23 {offsets = [24, 0], sizes = [64, 64], strides = [1, 1]} : vector<96x64xbf16> to vector<64x64xbf16>
    %80 = vector.extract_strided_slice %23 {offsets = [25, 0], sizes = [64, 64], strides = [1, 1]} : vector<96x64xbf16> to vector<64x64xbf16>
    %c0_i32_22 = arith.constant 0 : i32
    %81 = arith.sitofp %c0_i32_22 : i32 to bf16
    %82 = vector.shape_cast %20 : vector<64x1xi1> to vector<64x1xi1>
    %83 = vector.broadcast %82 : vector<64x1xi1> to vector<64x64xi1>
    %84 = vector.broadcast %81 : bf16 to vector<64x64xbf16>
    %85 = arith.select %83, %80, %84 : vector<64x64xi1>, vector<64x64xbf16>
    %c2 = arith.constant 2 : index
    %c0_23 = arith.constant 0 : index
    %c0_24 = arith.constant 0 : index
    %86 = vector.load %arg3[%c2, %c0_23, %c0_24] : memref<3x192x128xbf16, #tpu.memory_space<vmem>>, vector<1x192x128xbf16>
    %87 = vector.shape_cast %86 : vector<1x192x128xbf16> to vector<192x128xbf16>
    %88 = vector.extract_strided_slice %87 {offsets = [0, 0], sizes = [64, 128], strides = [1, 1]} : vector<192x128xbf16> to vector<64x128xbf16>
    %cst_25 = arith.constant dense<0.000000e+00> : vector<64x128xf32>
    %89 = tpu.matmul %78, %88, %cst_25 {dimension_numbers = #tpu.dot_dimension_numbers<[1], [0], [0], [1], [0, 0, 1, 1], [], []>} : vector<64x64xbf16>, vector<64x128xbf16>, vector<64x128xf32> -> vector<64x128xf32>
    %90 = arith.addf %72, %89 : vector<64x128xf32>
    %91 = vector.extract_strided_slice %87 {offsets = [64, 0], sizes = [64, 128], strides = [1, 1]} : vector<192x128xbf16> to vector<64x128xbf16>
    %cst_26 = arith.constant dense<0.000000e+00> : vector<64x128xf32>
    %92 = tpu.matmul %79, %91, %cst_26 {dimension_numbers = #tpu.dot_dimension_numbers<[1], [0], [0], [1], [0, 0, 1, 1], [], []>} : vector<64x64xbf16>, vector<64x128xbf16>, vector<64x128xf32> -> vector<64x128xf32>
    %93 = arith.addf %90, %92 : vector<64x128xf32>
    %94 = vector.extract_strided_slice %87 {offsets = [128, 0], sizes = [64, 128], strides = [1, 1]} : vector<192x128xbf16> to vector<64x128xbf16>
    %cst_27 = arith.constant dense<0.000000e+00> : vector<64x128xf32>
    %95 = tpu.matmul %85, %94, %cst_27 {dimension_numbers = #tpu.dot_dimension_numbers<[1], [0], [0], [1], [0, 0, 1, 1], [], []>} : vector<64x64xbf16>, vector<64x128xbf16>, vector<64x128xf32> -> vector<64x128xf32>
    %96 = arith.addf %93, %95 : vector<64x128xf32>
    %c0_28 = arith.constant 0 : index
    %c0_29 = arith.constant 0 : index
    %97 = vector.load %arg4[%c0_28, %c0_29] : memref<1x128xf32, #tpu.memory_space<vmem>>, vector<1x128xf32>
    %98 = vector.broadcast %97 : vector<1x128xf32> to vector<64x128xf32>
    %99 = arith.addf %96, %98 : vector<64x128xf32>
    %c0_30 = arith.constant 0 : index
    %c0_31 = arith.constant 0 : index
    %100 = vector.load %arg5[%c0_30, %c0_31] : memref<64x128xbf16, #tpu.memory_space<vmem>>, vector<64x128xbf16>
    %101 = arith.extf %100 : vector<64x128xbf16> to vector<64x128xf32>
    %102 = arith.addf %99, %101 : vector<64x128xf32>
    %cst_32 = arith.constant 0.000000e+00 : f32
    %103 = vector.broadcast %cst_32 : f32 to vector<64x128xf32>
    %104 = arith.maximumf %102, %103 : vector<64x128xf32>
    %105 = arith.truncf %104 : vector<64x128xf32> to vector<64x128xbf16>
    %c0_33 = arith.constant 0 : index
    %c0_34 = arith.constant 0 : index
    %106 = vector.load %arg6[%c0_33, %c0_34] : memref<64x128xbf16, #tpu.memory_space<vmem>>, vector<64x128xbf16>
    tpu.vector_store %arg6[%c0_33, %c0_34], %105 {strides = array<i32>} : memref<64x128xbf16, #tpu.memory_space<vmem>>, vector<64x128xbf16>,
    return
  }
  func.func @transform_0(%arg0: i32, %arg1: i32) -> (i32, i32) {
    %c0_i32 = arith.constant 0 : i32
    %c0_i32_0 = arith.constant 0 : i32
    return %arg0, %c0_i32 : i32, i32
  }
  func.func @transform_1(%arg0: i32, %arg1: i32) -> (i32, i32, i32) {
    %c0_i32 = arith.constant 0 : i32
    %c0_i32_0 = arith.constant 0 : i32
    %c0_i32_1 = arith.constant 0 : i32
    return %c0_i32, %c0_i32_0, %arg1 : i32, i32, i32
  }
  func.func @transform_2(%arg0: i32, %arg1: i32) -> (i32, i32) {
    %c0_i32 = arith.constant 0 : i32
    %c0_i32_0 = arith.constant 0 : i32
    return %c0_i32, %arg1 : i32, i32
  }
  func.func @transform_3(%arg0: i32, %arg1: i32) -> (i32, i32) {
    %c0_i32 = arith.constant 0 : i32
    return %arg0, %arg1 : i32, i32
  }
  func.func @transform_4(%arg0: i32, %arg1: i32) -> (i32, i32) {
    %c0_i32 = arith.constant 0 : i32
    return %arg0, %arg1 : i32, i32
  }
}

</mosaic_0001>

<llo_original>
// kernel: tpu_custom_call.1
$region0: #{tpu_custom_call.1}
  #allocation0 [shape = 'u32[]', space=smem, size = 0x4, offset = 0x4, fixed_abs, tag = 'smem constant byte address 0x4 - core index']
  #allocation1 [shape = 'u32[144,128]{1,0:T(1,128)}', space=vmem, size = 0x12000, scoped, tag = 'internal scratch']
  %s0 = inlined_call_operand.vmem [shape: bf16[128,64], index: 0, kind: input, shape index: {}]
  %s1 = inlined_call_operand.hbm [shape: bf16[3,192,128], index: 1, kind: input, shape index: {}]
  %s2 = inlined_call_operand.vmem [shape: f32[1,128], index: 2, kind: input, shape index: {}]
  %s3 = inlined_call_operand.vmem [shape: bf16[128,128], index: 3, kind: input, shape index: {}]
  %s4 = inlined_call_operand.hbm [shape: bf16[128,128], index: 4, kind: output, shape index: {}]
  %s5 = sld [smem:[#allocation0]]
  $region53: #{tpu_custom_call.1} parent=0
    _
  %s7 = ssub.s32 1, %s5
  %s8 = scalar_select 0, %s7, %s5
  $region1: #{tpu_custom_call.1} parent=0
    #allocation2 [shape = 'u8[147456]{0}', space=vmem, size = 0x24000, scoped, tag = 'input window, operand 1, single buffered']
    #allocation3 [shape = 's32[2]{0}', space=sflag, size = 0x8, scoped, tag = 'scoped memory for tpu_custom_call.1']
    #allocation4 [shape = 's32[2]{0}', space=sflag, size = 0x8, scoped, tag = 'scoped memory for tpu_custom_call.1']
    #allocation5 [shape = 'u8[32768]{0}', space=vmem, size = 0x8000, scoped, tag = 'output window, operand 0']
    %9 = vsyncpa [#allocation3], 0
    %10 = vsyncpa [#allocation4], 0
    %s11 = scalar_lea.sflag [#allocation4], 1
    %12 = vsyncpa %s11, 0
    loop: start=0, step=1, limit=4
    $region2: #{tpu_custom_call.1} parent=1 // loop_pre_header
      _
    $region3: #{tpu_custom_call.1} parent=1 // loop_header
      %s14 = sphi 0, %s18
      %p15 = scmp.ge.s32.totalorder %s14, 4
      %s21 = sphi 0, %s33
      %s22 = sphi 0, %s29
      %s23 = sphi 0, %s21
      %s24 = sphi 0, %s22
      %s25 = sphi 0, %s23
      %s26 = sphi 0, %s24
      %s36 = sphi 0, %s38
      %s39 = sphi 0, %s36
      %s40 = sphi 0, %s39
      %s56 = sphi 0, %s40
      %s62 = sphi 0, %s64
      %s65 = sphi 0, %s62
      %s66 = sphi 0, %s65
      %s82 = sphi 0, %s66
      %s88 = sphi 0, %s90
      %s91 = sphi 0, %s88
      %s92 = sphi 0, %s91
      %s108 = sphi 0, %s92
      %s116 = sphi 0, %s118
      %s119 = sphi 0, %s116
      %s120 = sphi 0, %s119
      %s136 = sphi 0, %s120
      %s144 = sphi 0, %s146
      %s147 = sphi 0, %s144
      %s148 = sphi 0, %s147
      %s164 = sphi 0, %s148
    $region4: #{tpu_custom_call.1} parent=1 // loop_header_branch
      %17 = sbr.rel (%p15) target = $region8
    $region5: #{tpu_custom_call.1} parent=1 // loop_body
      %s19 = ssub.s32 %s14, 1
      %s20 = ssub.s32 %s14, 2
      %s27 = sadd.s32 1, %s22
      %p28 = scmp.ge.s32.totalorder %s27, 1
      %s29 = scalar_select %p28, 0, %s27
      %s30 = sadd.s32 1, %s21
      %s31 = scalar_select %p28, %s30, %s21
      %p32 = scmp.ge.s32.totalorder %s31, 2
      %s33 = scalar_select %p32, 0, %s31
      %s34 = ssub.s32 %s21, %s33
      %p35 = scmp.eq.s32.totalorder %s34, 0
      %s37 = sadd.s32 %s36, 1
      %s38 = scalar_select %p35, %s36, %s37
      %p41 = pneg %p35
      %p42 = scmp.eq.s32.totalorder %s14, 1
      %p43 = por %p41, %p42
      %p44 = scmp.ne.s32.totalorder %s36, %s39
      %p45 = scmp.eq.s32.totalorder %s14, 0
      %p46 = por %p44, %p45
      %p47 = scmp.ne.s32.totalorder %s36, %s39
      %p48 = scmp.eq.s32.totalorder %s19, 1
      %p49 = por %p47, %p48
      %p50 = scmp.ne.s32.totalorder %s39, %s40
      %p51 = scmp.eq.s32.totalorder %s19, 0
      %p52 = por %p50, %p51
      %p53 = scmp.ne.s32.totalorder %s39, %s40
      %p54 = scmp.eq.s32.totalorder %s20, 1
      %p55 = por %p53, %p54
      %p57 = scmp.ne.s32.totalorder %s40, %s56
      %p58 = scmp.eq.s32.totalorder %s20, 0
      %p59 = por %p57, %p58
      %s60 = ssub.s32 %s22, %s29
      %p61 = scmp.eq.s32.totalorder %s60, 0
      %s63 = sadd.s32 %s62, 1
      %s64 = scalar_select %p61, %s62, %s63
      %p67 = pneg %p61
      %p68 = scmp.eq.s32.totalorder %s14, 1
      %p69 = por %p67, %p68
      %p70 = scmp.ne.s32.totalorder %s62, %s65
      %p71 = scmp.eq.s32.totalorder %s14, 0
      %p72 = por %p70, %p71
      %p73 = scmp.ne.s32.totalorder %s62, %s65
      %p74 = scmp.eq.s32.totalorder %s19, 1
      %p75 = por %p73, %p74
      %p76 = scmp.ne.s32.totalorder %s65, %s66
      %p77 = scmp.eq.s32.totalorder %s19, 0
      %p78 = por %p76, %p77
      %p79 = scmp.ne.s32.totalorder %s65, %s66
      %p80 = scmp.eq.s32.totalorder %s20, 1
      %p81 = por %p79, %p80
      %p83 = scmp.ne.s32.totalorder %s66, %s82
      %p84 = scmp.eq.s32.totalorder %s20, 0
      %p85 = por %p83, %p84
      %s86 = ssub.s32 %s22, %s29
      %p87 = scmp.eq.s32.totalorder %s86, 0
      %s89 = sadd.s32 %s88, 1
      %s90 = scalar_select %p87, %s88, %s89
      %p93 = pneg %p87
      %p94 = scmp.eq.s32.totalorder %s14, 1
      %p95 = por %p93, %p94
      %p96 = scmp.ne.s32.totalorder %s88, %s91
      %p97 = scmp.eq.s32.totalorder %s14, 0
      %p98 = por %p96, %p97
      %p99 = scmp.ne.s32.totalorder %s88, %s91
      %p100 = scmp.eq.s32.totalorder %s19, 1
      %p101 = por %p99, %p100
      %p102 = scmp.ne.s32.totalorder %s91, %s92
      %p103 = scmp.eq.s32.totalorder %s19, 0
      %p104 = por %p102, %p103
      %p105 = scmp.ne.s32.totalorder %s91, %s92
      %p106 = scmp.eq.s32.totalorder %s20, 1
      %p107 = por %p105, %p106
      %p109 = scmp.ne.s32.totalorder %s92, %s108
      %p110 = scmp.eq.s32.totalorder %s20, 0
      %p111 = por %p109, %p110
      %s112 = ssub.s32 %s21, %s33
      %s113 = ssub.s32 %s22, %s29
      %s114 = sor.u32 %s112, %s113
      %p115 = scmp.eq.s32.totalorder %s114, 0
      %s117 = sadd.s32 %s116, 1
      %s118 = scalar_select %p115, %s116, %s117
      %p121 = pneg %p115
      %p122 = scmp.eq.s32.totalorder %s14, 1
      %p123 = por %p121, %p122
      %p124 = scmp.ne.s32.totalorder %s116, %s119
      %p125 = scmp.eq.s32.totalorder %s14, 0
      %p126 = por %p124, %p125
      %p127 = scmp.ne.s32.totalorder %s116, %s119
      %p128 = scmp.eq.s32.totalorder %s19, 1
      %p129 = por %p127, %p128
      %p130 = scmp.ne.s32.totalorder %s119, %s120
      %p131 = scmp.eq.s32.totalorder %s19, 0
      %p132 = por %p130, %p131
      %p133 = scmp.ne.s32.totalorder %s119, %s120
      %p134 = scmp.eq.s32.totalorder %s20, 1
      %p135 = por %p133, %p134
      %p137 = scmp.ne.s32.totalorder %s120, %s136
      %p138 = scmp.eq.s32.totalorder %s20, 0
      %p139 = por %p137, %p138
      %s140 = ssub.s32 %s21, %s33
      %s141 = ssub.s32 %s22, %s29
      %s142 = sor.u32 %s140, %s141
      %p143 = scmp.eq.s32.totalorder %s142, 0
      %s145 = sadd.s32 %s144, 1
      %s146 = scalar_select %p143, %s144, %s145
      %p149 = pneg %p143
      %p150 = scmp.eq.s32.totalorder %s14, 1
      %p151 = por %p149, %p150
      %p152 = scmp.ne.s32.totalorder %s144, %s147
      %p153 = scmp.eq.s32.totalorder %s14, 0
      %p154 = por %p152, %p153
      %p155 = scmp.ne.s32.totalorder %s144, %s147
      %p156 = scmp.eq.s32.totalorder %s19, 1
      %p157 = por %p155, %p156
      %p158 = scmp.ne.s32.totalorder %s147, %s148
      %p159 = scmp.eq.s32.totalorder %s19, 0
      %p160 = por %p158, %p159
      %p161 = scmp.ne.s32.totalorder %s147, %s148
      %p162 = scmp.eq.s32.totalorder %s20, 1
      %p163 = por %p161, %p162
      %p165 = scmp.ne.s32.totalorder %s148, %s164
      %p166 = scmp.eq.s32.totalorder %s20, 0
      %p167 = por %p165, %p166
      %p168 = scmp.le.s32.totalorder 1, %s14
      %p169 = scmp.lt.s32.totalorder %s14, 3
      %p170 = pnand %p168, %p169
      %p171 = pneg %p170
      // Predicated region
      $region9: #{tpu_custom_call.1} parent=5 // pred_check
        _
      $region10: #{tpu_custom_call.1} parent=5 // pred_check_branch
        %173 = sbr.rel (%p170) target = $region12
      $region11: #{tpu_custom_call.1} parent=5 // pred_region
        %s174 = ssub.s32 %s14, 1
        // Predicated region
        $region13: #{tpu_custom_call.1} parent=11 // pred_check
          %p175 = pneg %p78
        $region14: #{tpu_custom_call.1} parent=11 // pred_check_branch
          %177 = sbr.rel (%p175) target = $region16
        $region15: #{tpu_custom_call.1} parent=11 // pred_region
          %s179 = ssub.s32 4608, 4608
          %180 = vsyncadd [#allocation3], %s179
          %s181 = smul.addr %s24, 64
          %s182 = scalar_lea.hbm %s1, %s181
          %s183 = sshll.u32 [#allocation2], 4
          %s184 = int_to_ptr.vmem [resolvable:$true] %s183
          %189 = dma.hbm_to_vmem [thread:$0]  %s182, 4608, %s184, [#allocation3], 64, 64, 4
        $region16: #{tpu_custom_call.1} parent=11 // pred_fallthru
          _
        // Predicated region
        $region17: #{tpu_custom_call.1} parent=11 // pred_check
          %p190 = pneg %p104
        $region18: #{tpu_custom_call.1} parent=11 // pred_check_branch
          %192 = sbr.rel (%p190) target = $region20
        $region19: #{tpu_custom_call.1} parent=11 // pred_region
          %p193 = scmp.lt.s32.totalorder %s24, 0
          %s194 = scalar_select %p193, %s24, 0
          %s195 = scalar_lea.vmem %s2, %s194
        $region20: #{tpu_custom_call.1} parent=11 // pred_fallthru
          _
      $region12: #{tpu_custom_call.1} parent=5 // pred_fallthru
        _
      %p196 = scmp.lt.s32.totalorder %s14, 2
      // Predicated region
      $region21: #{tpu_custom_call.1} parent=5 // pred_check
        %p197 = pneg %p196
      $region22: #{tpu_custom_call.1} parent=5 // pred_check_branch
        %199 = sbr.rel (%p197) target = $region24
      $region23: #{tpu_custom_call.1} parent=5 // pred_region
        // Predicated region
        $region25: #{tpu_custom_call.1} parent=23 // pred_check
          %p200 = pneg %p46
        $region26: #{tpu_custom_call.1} parent=23 // pred_check_branch
          %202 = sbr.rel (%p200) target = $region28
        $region27: #{tpu_custom_call.1} parent=23 // pred_region
          %s203 = smul.u32 8, %s21
          %p204 = scmp.lt.s32.totalorder %s203, 15
          %s205 = scalar_select %p204, %s203, 15
          %s206 = smul.addr %s205, 4
          %s207 = scalar_lea.vmem %s0, %s206
          %s208 = smul.u32 8, %s21
        $region28: #{tpu_custom_call.1} parent=23 // pred_fallthru
          _
        // Predicated region
        $region29: #{tpu_custom_call.1} parent=23 // pred_check
          %p209 = pneg %p126
        $region30: #{tpu_custom_call.1} parent=23 // pred_check_branch
          %211 = sbr.rel (%p209) target = $region32
        $region31: #{tpu_custom_call.1} parent=23 // pred_region
          %s212 = smul.u32 8, %s21
          %p213 = scmp.lt.s32.totalorder %s212, 15
          %s214 = scalar_select %p213, %s212, 15
          %p215 = scmp.lt.s32.totalorder %s22, 0
          %s216 = scalar_select %p215, %s22, 0
          %s217 = sadd.s32 %s216, %s214
          %s218 = smul.addr %s217, 4
          %s219 = scalar_lea.vmem %s3, %s218
          %s220 = smul.u32 8, %s21
        $region32: #{tpu_custom_call.1} parent=23 // pred_fallthru
          _
      $region24: #{tpu_custom_call.1} parent=5 // pred_fallthru
        _
      %p221 = scmp.le.s32.totalorder 1, %s14
      %p222 = scmp.lt.s32.totalorder %s14, 3
      %p223 = pnand %p221, %p222
      %p224 = pneg %p223
      // Predicated region
      $region33: #{tpu_custom_call.1} parent=5 // pred_check
        _
      $region34: #{tpu_custom_call.1} parent=5 // pred_check_branch
        %226 = sbr.rel (%p223) target = $region36
      $region35: #{tpu_custom_call.1} parent=5 // pred_region
        %s227 = ssub.s32 %s14, 1
        // Predicated region
        $region37: #{tpu_custom_call.1} parent=35 // pred_check
          %p228 = pneg %p78
        $region38: #{tpu_custom_call.1} parent=35 // pred_check_branch
          %230 = sbr.rel (%p228) target = $region40
        $region39: #{tpu_custom_call.1} parent=35 // pred_region
          %231 = dma.done [#allocation3], 4608
        $region40: #{tpu_custom_call.1} parent=35 // pred_fallthru
          _
        %s232 = smul.u32 8, %s23
        %p233 = scmp.lt.s32.totalorder %s232, 15
        %s234 = scalar_select %p233, %s232, 15
        %s235 = smul.addr %s234, 4
        %s236 = scalar_lea.vmem %s0, %s235
        %p237 = pneg %p52
        %p238 = pneg %p49
        %p239 = pneg %p78
        %p240 = pneg %p75
        %p241 = scmp.lt.s32.totalorder %s24, 0
        %s242 = scalar_select %p241, %s24, 0
        %s243 = scalar_lea.vmem %s2, %s242
        %p244 = pneg %p104
        %p245 = pneg %p101
        %s246 = smul.u32 8, %s23
        %p247 = scmp.lt.s32.totalorder %s246, 15
        %s248 = scalar_select %p247, %s246, 15
        %p249 = scmp.lt.s32.totalorder %s24, 0
        %s250 = scalar_select %p249, %s24, 0
        %s251 = sadd.s32 %s250, %s248
        %s252 = smul.addr %s251, 4
        %s253 = scalar_lea.vmem %s3, %s252
        %p254 = pneg %p132
        %p255 = pneg %p129
        %p256 = pneg %p160
        %p257 = pneg %p157
        %s258 = sand.u32 %s147, 1
        %s259 = scalar_lea.sflag [#allocation4], %s258
        %s260 = sand.u32 %s147, 1
        %s261 = smul.addr %s260, 32
        %s262 = scalar_lea.vmem [#allocation5], %s261
        %s263 = smul.u32 8, %s23
        %p264 = scmp.lt.s32.totalorder %s263, 15
        %s265 = scalar_select %p264, %s263, 15
        %s266 = smul.addr %s265, 4
        %s267 = scalar_lea.vmem %s0, %s266
        %s268 = smul.u32 8, %s23
        %p269 = scmp.lt.s32.totalorder %s24, 0
        %s270 = scalar_select %p269, %s24, 0
        %s271 = scalar_lea.vmem %s2, %s270
        %s272 = smul.u32 8, %s23
        %p273 = scmp.lt.s32.totalorder %s272, 15
        %s274 = scalar_select %p273, %s272, 15
        %p275 = scmp.lt.s32.totalorder %s24, 0
        %s276 = scalar_select %p275, %s24, 0
        %s277 = sadd.s32 %s276, %s274
        %s278 = smul.addr %s277, 4
        %s279 = scalar_lea.vmem %s3, %s278
        %s280 = smul.u32 8, %s23
        %s281 = smul.u32 8, %s23
        %v285 = vlaneseq
        %v286 = vshrl.u32 %v285, 7
        %v287 = vadd.s32 %v286, 8
        %v288 = vadd.s32 %v286, 16
        %v289 = vadd.s32 %v286, 24
        %v290 = vadd.s32 %v286, 32
        %v291 = vadd.s32 %v286, 40
        %v292 = vadd.s32 %v286, 48
        %v293 = vadd.s32 %v286, 56
        %vm294 = vcmp.lt.s32.totalorder %v286, 0
        %v295 = vsub.s32 0, %v286
        %v296 = vsel %vm294, %v295, %v286
        %v297 = vshrl.u32 %v296, 3
        %v298 = vand.u32 %v296, 7
        %v299 = vsub.s32 0, %v298
        %v300 = vsel %vm294, %v299, %v298
        %vm301 = vcmp.lt.s32.totalorder %v287, 0
        %v302 = vsub.s32 0, %v287
        %v303 = vsel %vm301, %v302, %v287
        %v304 = vshrl.u32 %v303, 3
        %v305 = vand.u32 %v303, 7
        %v306 = vsub.s32 0, %v305
        %v307 = vsel %vm301, %v306, %v305
        %vm308 = vcmp.lt.s32.totalorder %v288, 0
        %v309 = vsub.s32 0, %v288
        %v310 = vsel %vm308, %v309, %v288
        %v311 = vshrl.u32 %v310, 3
        %v312 = vand.u32 %v310, 7
        %v313 = vsub.s32 0, %v312
        %v314 = vsel %vm308, %v313, %v312
        %vm315 = vcmp.lt.s32.totalorder %v289, 0
        %v316 = vsub.s32 0, %v289
        %v317 = vsel %vm315, %v316, %v289
        %v318 = vshrl.u32 %v317, 3
        %v319 = vand.u32 %v317, 7
        %v320 = vsub.s32 0, %v319
        %v321 = vsel %vm315, %v320, %v319
        %vm322 = vcmp.lt.s32.totalorder %v290, 0
        %v323 = vsub.s32 0, %v290
        %v324 = vsel %vm322, %v323, %v290
        %v325 = vshrl.u32 %v324, 3
        %v326 = vand.u32 %v324, 7
        %v327 = vsub.s32 0, %v326
        %v328 = vsel %vm322, %v327, %v326
        %vm329 = vcmp.lt.s32.totalorder %v291, 0
        %v330 = vsub.s32 0, %v291
        %v331 = vsel %vm329, %v330, %v291
        %v332 = vshrl.u32 %v331, 3
        %v333 = vand.u32 %v331, 7
        %v334 = vsub.s32 0, %v333
        %v335 = vsel %vm329, %v334, %v333
        %vm336 = vcmp.lt.s32.totalorder %v292, 0
        %v337 = vsub.s32 0, %v292
        %v338 = vsel %vm336, %v337, %v292
        %v339 = vshrl.u32 %v338, 3
        %v340 = vand.u32 %v338, 7
        %v341 = vsub.s32 0, %v340
        %v342 = vsel %vm336, %v341, %v340
        %vm343 = vcmp.lt.s32.totalorder %v293, 0
        %v344 = vsub.s32 0, %v293
        %v345 = vsel %vm343, %v344, %v293
        %v346 = vshrl.u32 %v345, 3
        %v347 = vand.u32 %v345, 7
        %v348 = vsub.s32 0, %v347
        %v349 = vsel %vm343, %v348, %v347
        %vm350 = vcmp.ne.s32.totalorder %v300, 0
        %vm351 = vcmp.ne.s32.totalorder %v307, 0
        %vm352 = vcmp.ne.s32.totalorder %v314, 0
        %vm353 = vcmp.ne.s32.totalorder %v321, 0
        %vm354 = vcmp.ne.s32.totalorder %v328, 0
        %vm355 = vcmp.ne.s32.totalorder %v335, 0
        %vm356 = vcmp.ne.s32.totalorder %v342, 0
        %vm357 = vcmp.ne.s32.totalorder %v349, 0
        %vm358 = vcmp.lt.s32.totalorder %v300, 0
        %vm359 = vcmp.lt.s32.totalorder %v307, 0
        %vm360 = vcmp.lt.s32.totalorder %v314, 0
        %vm361 = vcmp.lt.s32.totalorder %v321, 0
        %vm362 = vcmp.lt.s32.totalorder %v328, 0
        %vm363 = vcmp.lt.s32.totalorder %v335, 0
        %vm364 = vcmp.lt.s32.totalorder %v342, 0
        %vm365 = vcmp.lt.s32.totalorder %v349, 0
        %vm366 = vmand %vm358, %vm350
        %vm367 = vmand %vm359, %vm351
        %vm368 = vmand %vm360, %vm352
        %vm369 = vmand %vm361, %vm353
        %vm370 = vmand %vm362, %vm354
        %vm371 = vmand %vm363, %vm355
        %vm372 = vmand %vm364, %vm356
        %vm373 = vmand %vm365, %vm357
        %v374 = vadd.s32 %v300, 8
        %v375 = vadd.s32 %v307, 8
        %v376 = vadd.s32 %v314, 8
        %v377 = vadd.s32 %v321, 8
        %v378 = vadd.s32 %v328, 8
        %v379 = vadd.s32 %v335, 8
        %v380 = vadd.s32 %v342, 8
        %v381 = vadd.s32 %v349, 8
        %v382 = vsel %vm366, %v374, %v300
        %v383 = vsel %vm367, %v375, %v307
        %v384 = vsel %vm368, %v376, %v314
        %v385 = vsel %vm369, %v377, %v321
        %v386 = vsel %vm370, %v378, %v328
        %v387 = vsel %vm371, %v379, %v335
        %v388 = vsel %vm372, %v380, %v342
        %v389 = vsel %vm373, %v381, %v349
        %vm390 = vcmp.ge.s32.totalorder %v382, 1
        %vm391 = vcmp.ge.s32.totalorder %v383, 1
        %vm392 = vcmp.ge.s32.totalorder %v384, 1
        %vm393 = vcmp.ge.s32.totalorder %v385, 1
        %vm394 = vcmp.ge.s32.totalorder %v386, 1
        %vm395 = vcmp.ge.s32.totalorder %v387, 1
        %vm396 = vcmp.ge.s32.totalorder %v388, 1
        %vm397 = vcmp.ge.s32.totalorder %v389, 1
        %vm398 = vcmp.le.s32.totalorder %v382, 6
        %vm399 = vcmp.le.s32.totalorder %v383, 6
        %vm400 = vcmp.le.s32.totalorder %v384, 6
        %vm401 = vcmp.le.s32.totalorder %v385, 6
        %vm402 = vcmp.le.s32.totalorder %v386, 6
        %vm403 = vcmp.le.s32.totalorder %v387, 6
        %vm404 = vcmp.le.s32.totalorder %v388, 6
        %vm405 = vcmp.le.s32.totalorder %v389, 6
        %v406 = vld [vmem:[%s267] sm:$0xf]
        %v407 = vld [vmem:[%s267 + $0x4] sm:$0xf]
        %v408 = vld [vmem:[%s267 + $0x8] sm:$0xf]
        %v409 = vld [vmem:[%s267 + $0xc] sm:$0xf]
        %v410 = vld [vmem:[%s267 + $0x10] sm:$0xf]
        %v411 = vld [vmem:[%s267 + $0x14] sm:$0xf]
        %v412 = vld [vmem:[%s267 + $0x18] sm:$0xf]
        %v413 = vld [vmem:[%s267 + $0x1c] sm:$0xf]
        %v422 = vunpack.c.l.b16 %v406
        %v423 = vunpack.c.l.b16 %v407
        %v424 = vunpack.c.l.b16 %v408
        %v425 = vunpack.c.l.b16 %v409
        %v426 = vunpack.c.l.b16 %v410
        %v427 = vunpack.c.l.b16 %v411
        %v428 = vunpack.c.l.b16 %v412
        %v429 = vunpack.c.l.b16 %v413
        %v430 = vpack.c.b16 %v423, %v422
        %v431 = vpack.c.b16 %v425, %v424
        %v432 = vpack.c.b16 %v427, %v426
        %v433 = vpack.c.b16 %v429, %v428
        %v438 = vsel %vm390, 1, 0
        %v439 = vsel %vm391, 1, 0
        %v440 = vsel %vm392, 1, 0
        %v441 = vsel %vm393, 1, 0
        %v442 = vsel %vm394, 1, 0
        %v443 = vsel %vm395, 1, 0
        %v444 = vsel %vm396, 1, 0
        %v445 = vsel %vm397, 1, 0
        %vm446 = vcmp.eq.s32.totalorder %v438, 1
        %vm447 = vcmp.eq.s32.totalorder %v439, 1
        %vm448 = vcmp.eq.s32.totalorder %v440, 1
        %vm449 = vcmp.eq.s32.totalorder %v441, 1
        %vm450 = vcmp.eq.s32.totalorder %v442, 1
        %vm451 = vcmp.eq.s32.totalorder %v443, 1
        %vm452 = vcmp.eq.s32.totalorder %v444, 1
        %vm453 = vcmp.eq.s32.totalorder %v445, 1
        %vm454 = vmpackc.low %vm446, %vm446
        %vm455 = vmpackc.low %vm447, %vm447
        %vm456 = vmpackc.low %vm448, %vm448
        %vm457 = vmpackc.low %vm449, %vm449
        %vm458 = vmpackc.low %vm450, %vm450
        %vm459 = vmpackc.low %vm451, %vm451
        %vm460 = vmpackc.low %vm452, %vm452
        %vm461 = vmpackc.low %vm453, %vm453
        %v462 = vsel %vm454, 65537, 0
        %v463 = vsel %vm455, 65537, 0
        %v464 = vsel %vm456, 65537, 0
        %v465 = vsel %vm457, 65537, 0
        %v466 = vsel %vm458, 65537, 0
        %v467 = vsel %vm459, 65537, 0
        %v468 = vsel %vm460, 65537, 0
        %v469 = vsel %vm461, 65537, 0
        %v470 = vunpack.c.l.b16 %v462
        %v471 = vunpack.c.l.b16 %v463
        %v472 = vunpack.c.l.b16 %v464
        %v473 = vunpack.c.l.b16 %v465
        %v474 = vunpack.c.l.b16 %v466
        %v475 = vunpack.c.l.b16 %v467
        %v476 = vunpack.c.l.b16 %v468
        %v477 = vunpack.c.l.b16 %v469
        %v478 = vpack.c.b16 %v471, %v470
        %v479 = vpack.c.b16 %v473, %v472
        %v480 = vpack.c.b16 %v475, %v474
        %v481 = vpack.c.b16 %v477, %v476
        %vm482 = vsmask.f32 3328
        %v484 = vshrl.u32 %v478, 16
        %v486 = vrot.slane %v484, 4
        %v487 = vshll.u32 %v478, 16
        %v489 = vrot.slane %v487, 5
        %v490 = vor.u32 %v486, %v489
        %v492 = vshrl.u32 %v479, 16
        %v494 = vrot.slane %v492, 4
        %v495 = vshll.u32 %v479, 16
        %v497 = vrot.slane %v495, 5
        %v498 = vor.u32 %v494, %v497
        %v499 = vsel %vm482, %v490, %v498
        %v501 = vshrl.u32 %v480, 16
        %v503 = vrot.slane %v501, 4
        %v504 = vshll.u32 %v480, 16
        %v506 = vrot.slane %v504, 5
        %v507 = vor.u32 %v503, %v506
        %v508 = vsel %vm482, %v498, %v507
        %v510 = vshrl.u32 %v481, 16
        %v512 = vrot.slane %v510, 4
        %v513 = vshll.u32 %v481, 16
        %v515 = vrot.slane %v513, 5
        %v516 = vor.u32 %v512, %v515
        %v517 = vsel %vm482, %v507, %v516
        %vm518 = vcmp.ne.s16.totalorder %v499, 0
        %vm519 = vcmp.ne.s16.totalorder %v508, 0
        %vm520 = vcmp.ne.s16.totalorder %v517, 0
        %vm521 = vcmp.ne.s16.totalorder %v516, 0
        %v522 = vsel %vm518, %v430, 0
        %v523 = vsel %vm519, %v431, 0
        %v524 = vsel %vm520, %v432, 0
        %v525 = vsel %vm521, %v433, 0
        %v526 = vsel %vm398, 1, 0
        %v527 = vsel %vm399, 1, 0
        %v528 = vsel %vm400, 1, 0
        %v529 = vsel %vm401, 1, 0
        %v530 = vsel %vm402, 1, 0
        %v531 = vsel %vm403, 1, 0
        %v532 = vsel %vm404, 1, 0
        %v533 = vsel %vm405, 1, 0
        %vm534 = vcmp.eq.s32.totalorder %v526, 1
        %vm535 = vcmp.eq.s32.totalorder %v527, 1
        %vm536 = vcmp.eq.s32.totalorder %v528, 1
        %vm537 = vcmp.eq.s32.totalorder %v529, 1
        %vm538 = vcmp.eq.s32.totalorder %v530, 1
        %vm539 = vcmp.eq.s32.totalorder %v531, 1
        %vm540 = vcmp.eq.s32.totalorder %v532, 1
        %vm541 = vcmp.eq.s32.totalorder %v533, 1
        %vm542 = vmpackc.low %vm534, %vm534
        %vm543 = vmpackc.low %vm535, %vm535
        %vm544 = vmpackc.low %vm536, %vm536
        %vm545 = vmpackc.low %vm537, %vm537
        %vm546 = vmpackc.low %vm538, %vm538
        %vm547 = vmpackc.low %vm539, %vm539
        %vm548 = vmpackc.low %vm540, %vm540
        %vm549 = vmpackc.low %vm541, %vm541
        %v550 = vsel %vm542, 65537, 0
        %v551 = vsel %vm543, 65537, 0
        %v552 = vsel %vm544, 65537, 0
        %v553 = vsel %vm545, 65537, 0
        %v554 = vsel %vm546, 65537, 0
        %v555 = vsel %vm547, 65537, 0
        %v556 = vsel %vm548, 65537, 0
        %v557 = vsel %vm549, 65537, 0
        %v558 = vunpack.c.l.b16 %v550
        %v559 = vunpack.c.l.b16 %v551
        %v560 = vunpack.c.l.b16 %v552
        %v561 = vunpack.c.l.b16 %v553
        %v562 = vunpack.c.l.b16 %v554
        %v563 = vunpack.c.l.b16 %v555
        %v564 = vunpack.c.l.b16 %v556
        %v565 = vunpack.c.l.b16 %v557
        %v566 = vpack.c.b16 %v559, %v558
        %v567 = vpack.c.b16 %v561, %v560
        %v568 = vpack.c.b16 %v563, %v562
        %v569 = vpack.c.b16 %v565, %v564
        %vm570 = vsmask.f32 4352
        %v572 = vshrl.u32 %v566, 16
        %v574 = vrot.slane %v572, 3
        %v575 = vshll.u32 %v566, 16
        %v577 = vrot.slane %v575, 4
        %v578 = vor.u32 %v574, %v577
        %v580 = vshrl.u32 %v567, 16
        %v582 = vrot.slane %v580, 3
        %v583 = vshll.u32 %v567, 16
        %v585 = vrot.slane %v583, 4
        %v586 = vor.u32 %v582, %v585
        %v587 = vsel %vm570, %v578, %v586
        %v589 = vshrl.u32 %v568, 16
        %v591 = vrot.slane %v589, 3
        %v592 = vshll.u32 %v568, 16
        %v594 = vrot.slane %v592, 4
        %v595 = vor.u32 %v591, %v594
        %v596 = vsel %vm570, %v586, %v595
        %v598 = vshrl.u32 %v569, 16
        %v600 = vrot.slane %v598, 3
        %v601 = vshll.u32 %v569, 16
        %v603 = vrot.slane %v601, 4
        %v604 = vor.u32 %v600, %v603
        %v605 = vsel %vm570, %v595, %v604
        %vm606 = vcmp.ne.s16.totalorder %v587, 0
        %vm607 = vcmp.ne.s16.totalorder %v596, 0
        %vm608 = vcmp.ne.s16.totalorder %v605, 0
        %vm609 = vcmp.ne.s16.totalorder %v604, 0
        %v610 = vsel %vm606, %v430, 0
        %v611 = vsel %vm607, %v431, 0
        %v612 = vsel %vm608, %v432, 0
        %v613 = vsel %vm609, %v433, 0
        %v614 = vld [vmem:[#allocation2] sm:$0xf]
        %v615 = vld [vmem:[#allocation2 + $0x4] sm:$0xf]
        %v616 = vld [vmem:[#allocation2 + $0x8] sm:$0xf]
        %v617 = vld [vmem:[#allocation2 + $0xc] sm:$0xf]
        %v618 = vld [vmem:[#allocation2 + $0x10] sm:$0xf]
        %v619 = vld [vmem:[#allocation2 + $0x14] sm:$0xf]
        %v620 = vld [vmem:[#allocation2 + $0x18] sm:$0xf]
        %v621 = vld [vmem:[#allocation2 + $0x1c] sm:$0xf]
        %v622 = vld [vmem:[#allocation2 + $0x20] sm:$0xf]
        %v623 = vld [vmem:[#allocation2 + $0x24] sm:$0xf]
        %v624 = vld [vmem:[#allocation2 + $0x28] sm:$0xf]
        %v625 = vld [vmem:[#allocation2 + $0x2c] sm:$0xf]
        %v626 = vld [vmem:[#allocation2 + $0x30] sm:$0xf]
        %v627 = vld [vmem:[#allocation2 + $0x34] sm:$0xf]
        %v628 = vld [vmem:[#allocation2 + $0x38] sm:$0xf]
        %v629 = vld [vmem:[#allocation2 + $0x3c] sm:$0xf]
        %v630 = vld [vmem:[#allocation2 + $0x40] sm:$0xf]
        %v631 = vld [vmem:[#allocation2 + $0x44] sm:$0xf]
        %v632 = vld [vmem:[#allocation2 + $0x48] sm:$0xf]
        %v633 = vld [vmem:[#allocation2 + $0x4c] sm:$0xf]
        %v634 = vld [vmem:[#allocation2 + $0x50] sm:$0xf]
        %v635 = vld [vmem:[#allocation2 + $0x54] sm:$0xf]
        %v636 = vld [vmem:[#allocation2 + $0x58] sm:$0xf]
        %v637 = vld [vmem:[#allocation2 + $0x5c] sm:$0xf]
        %vm639 = vcmask 1043456
        %v640 = vrot.slane 0, 4
        %v641 = vrot.slane %v430, 4
        %v642 = vsel %vm639, %v640, %v641
        %v643 = vrot.slane %v431, 4
        %v644 = vsel %vm639, %v641, %v643
        %v645 = vrot.slane %v432, 4
        %v646 = vsel %vm639, %v643, %v645
        %v647 = vrot.slane %v433, 4
        %v648 = vsel %vm639, %v645, %v647
        %v657 = vunpack.c.l.b16 %v622
        %v658 = vunpack.c.l.b16 %v623
        %v659 = vunpack.c.l.b16 %v624
        %v660 = vunpack.c.l.b16 %v625
        %v661 = vunpack.c.l.b16 %v626
        %v662 = vunpack.c.l.b16 %v627
        %v663 = vunpack.c.l.b16 %v628
        %v664 = vunpack.c.l.b16 %v629
        %v665 = vpack.c.b16 %v658, %v657
        %v666 = vpack.c.b16 %v660, %v659
        %v667 = vpack.c.b16 %v662, %v661
        %v668 = vpack.c.b16 %v664, %v663
        %vm673 = vcmask 523264
        %v675 = vsel %vm673, %v642, 0
        %v678 = vsel %vm673, %v644, 0
        %v681 = vsel %vm673, %v646, 0
        %v684 = vsel %vm673, %v648, 0
        %686 = vmatprep.subr.bf16.mxu0 0
        %687 = vmatpush1.bf16.msra.mxu0 %v665
        %688 = vmatprep.subr.bf16.mxu0 0
        %689 = vmatpush1.bf16.msra.mxu0 %v666
        %690 = vmatprep.subr.bf16.mxu0 0
        %691 = vmatpush1.bf16.msra.mxu0 %v667
        %692 = vmatprep.subr.bf16.mxu0 0
        %693 = vmatpush1.bf16.msra.mxu0 %v668
        %694 = vmatprep.subr.bf16.mxu0 0
        %695 = vmatpush1.bf16.msra.mxu0 0
        %696 = vmatprep.subr.bf16.mxu0 0
        %697 = vmatpush1.bf16.msra.mxu0 0
        %698 = vmatprep.subr.bf16.mxu0 0
        %699 = vmatpush1.bf16.msra.mxu0 0
        %700 = vmatprep.subr.bf16.mxu0 0
        %701 = vmatpush1.bf16.msra.mxu0 0
        %702 = vmatprep.subr.bf16.mxu0 0
        %703 = vmatpush1.bf16.msra.mxu0 0
        %704 = vmatprep.subr.bf16.mxu0 0
        %705 = vmatpush1.bf16.msra.mxu0 0
        %706 = vmatprep.subr.bf16.mxu0 0
        %707 = vmatpush1.bf16.msra.mxu0 0
        %708 = vmatprep.subr.bf16.mxu0 0
        %709 = vmatpush1.bf16.msra.mxu0 0
        %710 = vmatprep.subr.bf16.mxu0 0
        %711 = vmatpush1.bf16.msra.mxu0 0
        %712 = vmatprep.subr.bf16.mxu0 0
        %713 = vmatpush1.bf16.msra.mxu0 0
        %714 = vmatprep.subr.bf16.mxu0 0
        %715 = vmatpush1.bf16.msra.mxu0 0
        %716 = vmatprep.subr.bf16.mxu0 0
        %717 = vmatpush1.bf16.msra.mxu0 0
        %718 = vmatprep.mubr.bf16.mxu0 0
        %719 = vmatmul.mubr.bf16.gmra.mrb[0].mxu0 %v675
        %v720 = vpop.f32.mrb[0].mxu0
        %v721 = vadd.f32 0.0, %v720
        %v722 = vpop.f32.mrb[0].mxu0
        %v723 = vpop.f32.mrb[0].mxu0
        %v724 = vadd.f32 0.0, %v723
        %v725 = vpop.f32.mrb[0].mxu0
        %726 = vmatprep.mubr.bf16.mxu0 0
        %727 = vmatmul.mubr.bf16.gmra.mrb[0].mxu0 %v678
        %v728 = vpop.f32.mrb[0].mxu0
        %v729 = vadd.f32 0.0, %v728
        %v730 = vpop.f32.mrb[0].mxu0
        %v731 = vpop.f32.mrb[0].mxu0
        %v732 = vadd.f32 0.0, %v731
        %v733 = vpop.f32.mrb[0].mxu0
        %734 = vmatprep.mubr.bf16.mxu0 0
        %735 = vmatmul.mubr.bf16.gmra.mrb[0].mxu0 %v681
        %v736 = vpop.f32.mrb[0].mxu0
        %v737 = vadd.f32 0.0, %v736
        %v738 = vpop.f32.mrb[0].mxu0
        %v739 = vpop.f32.mrb[0].mxu0
        %v740 = vadd.f32 0.0, %v739
        %v741 = vpop.f32.mrb[0].mxu0
        %742 = vmatprep.mubr.bf16.mxu0 0
        %743 = vmatmul.mubr.bf16.gmra.mrb[0].mxu0 %v684
        %v744 = vpop.f32.mrb[0].mxu0
        %v745 = vadd.f32 0.0, %v744
        %v746 = vpop.f32.mrb[0].mxu0
        %v747 = vpop.f32.mrb[0].mxu0
        %v748 = vadd.f32 0.0, %v747
        %v749 = vpop.f32.mrb[0].mxu0
        %750 = vdwg.mxu0
        %v752 = vshrl.u32 0, 16
        %v754 = vrot.slane %v752, 3
        %v755 = vshll.u32 0, 16
        %v757 = vrot.slane %v755, 4
        %v758 = vor.u32 %v754, %v757
        %v760 = vshrl.u32 %v522, 16
        %v762 = vrot.slane %v760, 3
        %v763 = vshll.u32 %v522, 16
        %v765 = vrot.slane %v763, 4
        %v766 = vor.u32 %v762, %v765
        %v767 = vsel %vm570, %v758, %v766
        %v769 = vshrl.u32 %v523, 16
        %v771 = vrot.slane %v769, 3
        %v772 = vshll.u32 %v523, 16
        %v774 = vrot.slane %v772, 4
        %v775 = vor.u32 %v771, %v774
        %v776 = vsel %vm570, %v766, %v775
        %v778 = vshrl.u32 %v524, 16
        %v780 = vrot.slane %v778, 3
        %v781 = vshll.u32 %v524, 16
        %v783 = vrot.slane %v781, 4
        %v784 = vor.u32 %v780, %v783
        %v785 = vsel %vm570, %v775, %v784
        %v787 = vshrl.u32 %v525, 16
        %v789 = vrot.slane %v787, 3
        %v790 = vshll.u32 %v525, 16
        %v792 = vrot.slane %v790, 4
        %v793 = vor.u32 %v789, %v792
        %v794 = vsel %vm570, %v784, %v793
        %v803 = vunpack.c.l.b16 %v614
        %v804 = vunpack.c.l.b16 %v615
        %v805 = vunpack.c.l.b16 %v616
        %v806 = vunpack.c.l.b16 %v617
        %v807 = vunpack.c.l.b16 %v618
        %v808 = vunpack.c.l.b16 %v619
        %v809 = vunpack.c.l.b16 %v620
        %v810 = vunpack.c.l.b16 %v621
        %v811 = vpack.c.b16 %v804, %v803
        %v812 = vpack.c.b16 %v806, %v805
        %v813 = vpack.c.b16 %v808, %v807
        %v814 = vpack.c.b16 %v810, %v809
        %v820 = vsel %vm673, %v767, 0
        %v823 = vsel %vm673, %v776, 0
        %v826 = vsel %vm673, %v785, 0
        %v829 = vsel %vm673, %v794, 0
        %831 = vmatprep.subr.bf16.mxu0 0
        %832 = vmatpush1.bf16.msra.mxu0 %v811
        %833 = vmatprep.subr.bf16.mxu0 0
        %834 = vmatpush1.bf16.msra.mxu0 %v812
        %835 = vmatprep.subr.bf16.mxu0 0
        %836 = vmatpush1.bf16.msra.mxu0 %v813
        %837 = vmatprep.subr.bf16.mxu0 0
        %838 = vmatpush1.bf16.msra.mxu0 %v814
        %839 = vmatprep.subr.bf16.mxu0 0
        %840 = vmatpush1.bf16.msra.mxu0 0
        %841 = vmatprep.subr.bf16.mxu0 0
        %842 = vmatpush1.bf16.msra.mxu0 0
        %843 = vmatprep.subr.bf16.mxu0 0
        %844 = vmatpush1.bf16.msra.mxu0 0
        %845 = vmatprep.subr.bf16.mxu0 0
        %846 = vmatpush1.bf16.msra.mxu0 0
        %847 = vmatprep.subr.bf16.mxu0 0
        %848 = vmatpush1.bf16.msra.mxu0 0
        %849 = vmatprep.subr.bf16.mxu0 0
        %850 = vmatpush1.bf16.msra.mxu0 0
        %851 = vmatprep.subr.bf16.mxu0 0
        %852 = vmatpush1.bf16.msra.mxu0 0
        %853 = vmatprep.subr.bf16.mxu0 0
        %854 = vmatpush1.bf16.msra.mxu0 0
        %855 = vmatprep.subr.bf16.mxu0 0
        %856 = vmatpush1.bf16.msra.mxu0 0
        %857 = vmatprep.subr.bf16.mxu0 0
        %858 = vmatpush1.bf16.msra.mxu0 0
        %859 = vmatprep.subr.bf16.mxu0 0
        %860 = vmatpush1.bf16.msra.mxu0 0
        %861 = vmatprep.subr.bf16.mxu0 0
        %862 = vmatpush1.bf16.msra.mxu0 0
        %863 = vmatprep.mubr.bf16.mxu0 0
        %864 = vmatmul.mubr.bf16.gmra.mrb[0].mxu0 %v820
        %v865 = vpop.f32.mrb[0].mxu0
        %v866 = vadd.f32 %v721, %v865
        %v867 = vpop.f32.mrb[0].mxu0
        %v868 = vpop.f32.mrb[0].mxu0
        %v869 = vadd.f32 %v724, %v868
        %v870 = vpop.f32.mrb[0].mxu0
        %871 = vmatprep.mubr.bf16.mxu0 0
        %872 = vmatmul.mubr.bf16.gmra.mrb[0].mxu0 %v823
        %v873 = vpop.f32.mrb[0].mxu0
        %v874 = vadd.f32 %v729, %v873
        %v875 = vpop.f32.mrb[0].mxu0
        %v876 = vpop.f32.mrb[0].mxu0
        %v877 = vadd.f32 %v732, %v876
        %v878 = vpop.f32.mrb[0].mxu0
        %879 = vmatprep.mubr.bf16.mxu0 0
        %880 = vmatmul.mubr.bf16.gmra.mrb[0].mxu0 %v826
        %v881 = vpop.f32.mrb[0].mxu0
        %v882 = vadd.f32 %v737, %v881
        %v883 = vpop.f32.mrb[0].mxu0
        %v884 = vpop.f32.mrb[0].mxu0
        %v885 = vadd.f32 %v740, %v884
        %v886 = vpop.f32.mrb[0].mxu0
        %887 = vmatprep.mubr.bf16.mxu0 0
        %888 = vmatmul.mubr.bf16.gmra.mrb[0].mxu0 %v829
        %v889 = vpop.f32.mrb[0].mxu0
        %v890 = vadd.f32 %v745, %v889
        %v891 = vpop.f32.mrb[0].mxu0
        %v892 = vpop.f32.mrb[0].mxu0
        %v893 = vadd.f32 %v748, %v892
        %v894 = vpop.f32.mrb[0].mxu0
        %895 = vdwg.mxu0
        %v896 = vrot.slane %v752, 4
        %v897 = vrot.slane %v755, 5
        %v898 = vor.u32 %v896, %v897
        %v900 = vshrl.u32 %v610, 16
        %v902 = vrot.slane %v900, 4
        %v903 = vshll.u32 %v610, 16
        %v905 = vrot.slane %v903, 5
        %v906 = vor.u32 %v902, %v905
        %v907 = vsel %vm482, %v898, %v906
        %v909 = vshrl.u32 %v611, 16
        %v911 = vrot.slane %v909, 4
        %v912 = vshll.u32 %v611, 16
        %v914 = vrot.slane %v912, 5
        %v915 = vor.u32 %v911, %v914
        %v916 = vsel %vm482, %v906, %v915
        %v918 = vshrl.u32 %v612, 16
        %v920 = vrot.slane %v918, 4
        %v921 = vshll.u32 %v612, 16
        %v923 = vrot.slane %v921, 5
        %v924 = vor.u32 %v920, %v923
        %v925 = vsel %vm482, %v915, %v924
        %v927 = vshrl.u32 %v613, 16
        %v929 = vrot.slane %v927, 4
        %v930 = vshll.u32 %v613, 16
        %v932 = vrot.slane %v930, 5
        %v933 = vor.u32 %v929, %v932
        %v934 = vsel %vm482, %v924, %v933
        %v943 = vunpack.c.l.b16 %v630
        %v944 = vunpack.c.l.b16 %v631
        %v945 = vunpack.c.l.b16 %v632
        %v946 = vunpack.c.l.b16 %v633
        %v947 = vunpack.c.l.b16 %v634
        %v948 = vunpack.c.l.b16 %v635
        %v949 = vunpack.c.l.b16 %v636
        %v950 = vunpack.c.l.b16 %v637
        %v951 = vpack.c.b16 %v944, %v943
        %v952 = vpack.c.b16 %v946, %v945
        %v953 = vpack.c.b16 %v948, %v947
        %v954 = vpack.c.b16 %v950, %v949
        %v960 = vsel %vm673, %v907, 0
        %v963 = vsel %vm673, %v916, 0
        %v966 = vsel %vm673, %v925, 0
        %v969 = vsel %vm673, %v934, 0
        %971 = vmatprep.subr.bf16.mxu0 0
        %972 = vmatpush1.bf16.msra.mxu0 %v951
        %973 = vmatprep.subr.bf16.mxu0 0
        %974 = vmatpush1.bf16.msra.mxu0 %v952
        %975 = vmatprep.subr.bf16.mxu0 0
        %976 = vmatpush1.bf16.msra.mxu0 %v953
        %977 = vmatprep.subr.bf16.mxu0 0
        %978 = vmatpush1.bf16.msra.mxu0 %v954
        %979 = vmatprep.subr.bf16.mxu0 0
        %980 = vmatpush1.bf16.msra.mxu0 0
        %981 = vmatprep.subr.bf16.mxu0 0
        %982 = vmatpush1.bf16.msra.mxu0 0
        %983 = vmatprep.subr.bf16.mxu0 0
        %984 = vmatpush1.bf16.msra.mxu0 0
        %985 = vmatprep.subr.bf16.mxu0 0
        %986 = vmatpush1.bf16.msra.mxu0 0
        %987 = vmatprep.subr.bf16.mxu0 0
        %988 = vmatpush1.bf16.msra.mxu0 0
        %989 = vmatprep.subr.bf16.mxu0 0
        %990 = vmatpush1.bf16.msra.mxu0 0
        %991 = vmatprep.subr.bf16.mxu0 0
        %992 = vmatpush1.bf16.msra.mxu0 0
        %993 = vmatprep.subr.bf16.mxu0 0
        %994 = vmatpush1.bf16.msra.mxu0 0
        %995 = vmatprep.subr.bf16.mxu0 0
        %996 = vmatpush1.bf16.msra.mxu0 0
        %997 = vmatprep.subr.bf16.mxu0 0
        %998 = vmatpush1.bf16.msra.mxu0 0
        %999 = vmatprep.subr.bf16.mxu0 0
        %1000 = vmatpush1.bf16.msra.mxu0 0
        %1001 = vmatprep.subr.bf16.mxu0 0
        %1002 = vmatpush1.bf16.msra.mxu0 0
        %1003 = vmatprep.mubr.bf16.mxu0 0
        %1004 = vmatmul.mubr.bf16.gmra.mrb[0].mxu0 %v960
        %v1005 = vpop.f32.mrb[0].mxu0
        %v1006 = vadd.f32 0.0, %v1005
        %v1007 = vpop.f32.mrb[0].mxu0
        %v1008 = vpop.f32.mrb[0].mxu0
        %v1009 = vadd.f32 0.0, %v1008
        %v1010 = vpop.f32.mrb[0].mxu0
        %1011 = vmatprep.mubr.bf16.mxu0 0
        %1012 = vmatmul.mubr.bf16.gmra.mrb[0].mxu0 %v963
        %v1013 = vpop.f32.mrb[0].mxu0
        %v1014 = vadd.f32 0.0, %v1013
        %v1015 = vpop.f32.mrb[0].mxu0
        %v1016 = vpop.f32.mrb[0].mxu0
        %v1017 = vadd.f32 0.0, %v1016
        %v1018 = vpop.f32.mrb[0].mxu0
        %1019 = vmatprep.mubr.bf16.mxu0 0
        %1020 = vmatmul.mubr.bf16.gmra.mrb[0].mxu0 %v966
        %v1021 = vpop.f32.mrb[0].mxu0
        %v1022 = vadd.f32 0.0, %v1021
        %v1023 = vpop.f32.mrb[0].mxu0
        %v1024 = vpop.f32.mrb[0].mxu0
        %v1025 = vadd.f32 0.0, %v1024
        %v1026 = vpop.f32.mrb[0].mxu0
        %1027 = vmatprep.mubr.bf16.mxu0 0
        %1028 = vmatmul.mubr.bf16.gmra.mrb[0].mxu0 %v969
        %v1029 = vpop.f32.mrb[0].mxu0
        %v1030 = vadd.f32 0.0, %v1029
        %v1031 = vpop.f32.mrb[0].mxu0
        %v1032 = vpop.f32.mrb[0].mxu0
        %v1033 = vadd.f32 0.0, %v1032
        %v1034 = vpop.f32.mrb[0].mxu0
        %1035 = vdwg.mxu0
        %v1036 = vadd.f32 %v866, %v1006
        %v1037 = vadd.f32 %v869, %v1009
        %v1038 = vadd.f32 %v874, %v1014
        %v1039 = vadd.f32 %v877, %v1017
        %v1040 = vadd.f32 %v882, %v1022
        %v1041 = vadd.f32 %v885, %v1025
        %v1042 = vadd.f32 %v890, %v1030
        %v1043 = vadd.f32 %v893, %v1033
        %vm1044 = vsmask.f32 7424
        %v1045 = vrot.slane %v487, 1
        %v1046 = vor.u32 %v484, %v1045
        %v1047 = vrot.slane %v495, 1
        %v1048 = vsel %vm1044, %v1046, %v1047
        %v1049 = vor.u32 %v492, %v1047
        %v1050 = vrot.slane %v504, 1
        %v1051 = vsel %vm1044, %v1049, %v1050
        %v1052 = vor.u32 %v501, %v1050
        %v1053 = vrot.slane %v513, 1
        %v1054 = vsel %vm1044, %v1052, %v1053
        %v1055 = vor.u32 %v510, %v1053
        %vm1056 = vcmp.ne.s16.totalorder %v1048, 0
        %vm1057 = vcmp.ne.s16.totalorder %v1051, 0
        %vm1058 = vcmp.ne.s16.totalorder %v1054, 0
        %vm1059 = vcmp.ne.s16.totalorder %v1055, 0
        %v1060 = vsel %vm1056, %v430, 0
        %v1061 = vsel %vm1057, %v431, 0
        %v1062 = vsel %vm1058, %v432, 0
        %v1063 = vsel %vm1059, %v433, 0
        %vm1064 = vsmask.f32 256
        %v1065 = vrot.slane %v572, 7
        %v1066 = vor.u32 %v1065, %v575
        %v1067 = vrot.slane %v580, 7
        %v1068 = vor.u32 %v1067, %v583
        %v1069 = vsel %vm1064, %v1065, %v1068
        %v1070 = vrot.slane %v589, 7
        %v1071 = vor.u32 %v1070, %v592
        %v1072 = vsel %vm1064, %v1067, %v1071
        %v1073 = vrot.slane %v598, 7
        %v1074 = vor.u32 %v1073, %v601
        %v1075 = vsel %vm1064, %v1070, %v1074
        %vm1076 = vcmp.ne.s16.totalorder %v1066, 0
        %vm1077 = vcmp.ne.s16.totalorder %v1069, 0
        %vm1078 = vcmp.ne.s16.totalorder %v1072, 0
        %vm1079 = vcmp.ne.s16.totalorder %v1075, 0
        %v1080 = vsel %vm1076, %v430, 0
        %v1081 = vsel %vm1077, %v431, 0
        %v1082 = vsel %vm1078, %v432, 0
        %v1083 = vsel %vm1079, %v433, 0
        %s1084 = scalar_lea.vmem [#allocation2], 96
        %v1085 = vld [vmem:[%s1084] sm:$0xf]
        %v1086 = vld [vmem:[%s1084 + $0x4] sm:$0xf]
        %v1087 = vld [vmem:[%s1084 + $0x8] sm:$0xf]
        %v1088 = vld [vmem:[%s1084 + $0xc] sm:$0xf]
        %v1089 = vld [vmem:[%s1084 + $0x10] sm:$0xf]
        %v1090 = vld [vmem:[%s1084 + $0x14] sm:$0xf]
        %v1091 = vld [vmem:[%s1084 + $0x18] sm:$0xf]
        %v1092 = vld [vmem:[%s1084 + $0x1c] sm:$0xf]
        %v1093 = vld [vmem:[%s1084 + $0x20] sm:$0xf]
        %v1094 = vld [vmem:[%s1084 + $0x24] sm:$0xf]
        %v1095 = vld [vmem:[%s1084 + $0x28] sm:$0xf]
        %v1096 = vld [vmem:[%s1084 + $0x2c] sm:$0xf]
        %v1097 = vld [vmem:[%s1084 + $0x30] sm:$0xf]
        %v1098 = vld [vmem:[%s1084 + $0x34] sm:$0xf]
        %v1099 = vld [vmem:[%s1084 + $0x38] sm:$0xf]
        %v1100 = vld [vmem:[%s1084 + $0x3c] sm:$0xf]
        %v1101 = vld [vmem:[%s1084 + $0x40] sm:$0xf]
        %v1102 = vld [vmem:[%s1084 + $0x44] sm:$0xf]
        %v1103 = vld [vmem:[%s1084 + $0x48] sm:$0xf]
        %v1104 = vld [vmem:[%s1084 + $0x4c] sm:$0xf]
        %v1105 = vld [vmem:[%s1084 + $0x50] sm:$0xf]
        %v1106 = vld [vmem:[%s1084 + $0x54] sm:$0xf]
        %v1107 = vld [vmem:[%s1084 + $0x58] sm:$0xf]
        %v1108 = vld [vmem:[%s1084 + $0x5c] sm:$0xf]
        %v1109 = vrot.slane %v752, 7
        %v1111 = vshrl.u32 %v1060, 16
        %v1113 = vrot.slane %v1111, 7
        %v1114 = vshll.u32 %v1060, 16
        %v1116 = vor.u32 %v1113, %v1114
        %v1117 = vsel %vm1064, %v1109, %v1116
        %v1119 = vshrl.u32 %v1061, 16
        %v1121 = vrot.slane %v1119, 7
        %v1122 = vshll.u32 %v1061, 16
        %v1124 = vor.u32 %v1121, %v1122
        %v1125 = vsel %vm1064, %v1113, %v1124
        %v1127 = vshrl.u32 %v1062, 16
        %v1129 = vrot.slane %v1127, 7
        %v1130 = vshll.u32 %v1062, 16
        %v1132 = vor.u32 %v1129, %v1130
        %v1133 = vsel %vm1064, %v1121, %v1132
        %v1135 = vshrl.u32 %v1063, 16
        %v1137 = vrot.slane %v1135, 7
        %v1138 = vshll.u32 %v1063, 16
        %v1140 = vor.u32 %v1137, %v1138
        %v1141 = vsel %vm1064, %v1129, %v1140
        %v1150 = vunpack.c.l.b16 %v1085
        %v1151 = vunpack.c.l.b16 %v1086
        %v1152 = vunpack.c.l.b16 %v1087
        %v1153 = vunpack.c.l.b16 %v1088
        %v1154 = vunpack.c.l.b16 %v1089
        %v1155 = vunpack.c.l.b16 %v1090
        %v1156 = vunpack.c.l.b16 %v1091
        %v1157 = vunpack.c.l.b16 %v1092
        %v1158 = vpack.c.b16 %v1151, %v1150
        %v1159 = vpack.c.b16 %v1153, %v1152
        %v1160 = vpack.c.b16 %v1155, %v1154
        %v1161 = vpack.c.b16 %v1157, %v1156
        %v1167 = vsel %vm673, %v1117, 0
        %v1170 = vsel %vm673, %v1125, 0
        %v1173 = vsel %vm673, %v1133, 0
        %v1176 = vsel %vm673, %v1141, 0
        %1178 = vmatprep.subr.bf16.mxu0 0
        %1179 = vmatpush1.bf16.msra.mxu0 %v1158
        %1180 = vmatprep.subr.bf16.mxu0 0
        %1181 = vmatpush1.bf16.msra.mxu0 %v1159
        %1182 = vmatprep.subr.bf16.mxu0 0
        %1183 = vmatpush1.bf16.msra.mxu0 %v1160
        %1184 = vmatprep.subr.bf16.mxu0 0
        %1185 = vmatpush1.bf16.msra.mxu0 %v1161
        %1186 = vmatprep.subr.bf16.mxu0 0
        %1187 = vmatpush1.bf16.msra.mxu0 0
        %1188 = vmatprep.subr.bf16.mxu0 0
        %1189 = vmatpush1.bf16.msra.mxu0 0
        %1190 = vmatprep.subr.bf16.mxu0 0
        %1191 = vmatpush1.bf16.msra.mxu0 0
        %1192 = vmatprep.subr.bf16.mxu0 0
        %1193 = vmatpush1.bf16.msra.mxu0 0
        %1194 = vmatprep.subr.bf16.mxu0 0
        %1195 = vmatpush1.bf16.msra.mxu0 0
        %1196 = vmatprep.subr.bf16.mxu0 0
        %1197 = vmatpush1.bf16.msra.mxu0 0
        %1198 = vmatprep.subr.bf16.mxu0 0
        %1199 = vmatpush1.bf16.msra.mxu0 0
        %1200 = vmatprep.subr.bf16.mxu0 0
        %1201 = vmatpush1.bf16.msra.mxu0 0
        %1202 = vmatprep.subr.bf16.mxu0 0
        %1203 = vmatpush1.bf16.msra.mxu0 0
        %1204 = vmatprep.subr.bf16.mxu0 0
        %1205 = vmatpush1.bf16.msra.mxu0 0
        %1206 = vmatprep.subr.bf16.mxu0 0
        %1207 = vmatpush1.bf16.msra.mxu0 0
        %1208 = vmatprep.subr.bf16.mxu0 0
        %1209 = vmatpush1.bf16.msra.mxu0 0
        %1210 = vmatprep.mubr.bf16.mxu0 0
        %1211 = vmatmul.mubr.bf16.gmra.mrb[0].mxu0 %v1167
        %v1212 = vpop.f32.mrb[0].mxu0
        %v1213 = vadd.f32 0.0, %v1212
        %v1214 = vpop.f32.mrb[0].mxu0
        %v1215 = vpop.f32.mrb[0].mxu0
        %v1216 = vadd.f32 0.0, %v1215
        %v1217 = vpop.f32.mrb[0].mxu0
        %1218 = vmatprep.mubr.bf16.mxu0 0
        %1219 = vmatmul.mubr.bf16.gmra.mrb[0].mxu0 %v1170
        %v1220 = vpop.f32.mrb[0].mxu0
        %v1221 = vadd.f32 0.0, %v1220
        %v1222 = vpop.f32.mrb[0].mxu0
        %v1223 = vpop.f32.mrb[0].mxu0
        %v1224 = vadd.f32 0.0, %v1223
        %v1225 = vpop.f32.mrb[0].mxu0
        %1226 = vmatprep.mubr.bf16.mxu0 0
        %1227 = vmatmul.mubr.bf16.gmra.mrb[0].mxu0 %v1173
        %v1228 = vpop.f32.mrb[0].mxu0
        %v1229 = vadd.f32 0.0, %v1228
        %v1230 = vpop.f32.mrb[0].mxu0
        %v1231 = vpop.f32.mrb[0].mxu0
        %v1232 = vadd.f32 0.0, %v1231
        %v1233 = vpop.f32.mrb[0].mxu0
        %1234 = vmatprep.mubr.bf16.mxu0 0
        %1235 = vmatmul.mubr.bf16.gmra.mrb[0].mxu0 %v1176
        %v1236 = vpop.f32.mrb[0].mxu0
        %v1237 = vadd.f32 0.0, %v1236
        %v1238 = vpop.f32.mrb[0].mxu0
        %v1239 = vpop.f32.mrb[0].mxu0
        %v1240 = vadd.f32 0.0, %v1239
        %v1241 = vpop.f32.mrb[0].mxu0
        %1242 = vdwg.mxu0
        %v1243 = vadd.f32 %v1036, %v1213
        %v1244 = vadd.f32 %v1037, %v1216
        %v1245 = vadd.f32 %v1038, %v1221
        %v1246 = vadd.f32 %v1039, %v1224
        %v1247 = vadd.f32 %v1040, %v1229
        %v1248 = vadd.f32 %v1041, %v1232
        %v1249 = vadd.f32 %v1042, %v1237
        %v1250 = vadd.f32 %v1043, %v1240
        %v1259 = vunpack.c.l.b16 %v1093
        %v1260 = vunpack.c.l.b16 %v1094
        %v1261 = vunpack.c.l.b16 %v1095
        %v1262 = vunpack.c.l.b16 %v1096
        %v1263 = vunpack.c.l.b16 %v1097
        %v1264 = vunpack.c.l.b16 %v1098
        %v1265 = vunpack.c.l.b16 %v1099
        %v1266 = vunpack.c.l.b16 %v1100
        %v1267 = vpack.c.b16 %v1260, %v1259
        %v1268 = vpack.c.b16 %v1262, %v1261
        %v1269 = vpack.c.b16 %v1264, %v1263
        %v1270 = vpack.c.b16 %v1266, %v1265
        %v1276 = vsel %vm673, %v430, 0
        %v1279 = vsel %vm673, %v431, 0
        %v1282 = vsel %vm673, %v432, 0
        %v1285 = vsel %vm673, %v433, 0
        %1287 = vmatprep.subr.bf16.mxu0 0
        %1288 = vmatpush1.bf16.msra.mxu0 %v1267
        %1289 = vmatprep.subr.bf16.mxu0 0
        %1290 = vmatpush1.bf16.msra.mxu0 %v1268
        %1291 = vmatprep.subr.bf16.mxu0 0
        %1292 = vmatpush1.bf16.msra.mxu0 %v1269
        %1293 = vmatprep.subr.bf16.mxu0 0
        %1294 = vmatpush1.bf16.msra.mxu0 %v1270
        %1295 = vmatprep.subr.bf16.mxu0 0
        %1296 = vmatpush1.bf16.msra.mxu0 0
        %1297 = vmatprep.subr.bf16.mxu0 0
        %1298 = vmatpush1.bf16.msra.mxu0 0
        %1299 = vmatprep.subr.bf16.mxu0 0
        %1300 = vmatpush1.bf16.msra.mxu0 0
        %1301 = vmatprep.subr.bf16.mxu0 0
        %1302 = vmatpush1.bf16.msra.mxu0 0
        %1303 = vmatprep.subr.bf16.mxu0 0
        %1304 = vmatpush1.bf16.msra.mxu0 0
        %1305 = vmatprep.subr.bf16.mxu0 0
        %1306 = vmatpush1.bf16.msra.mxu0 0
        %1307 = vmatprep.subr.bf16.mxu0 0
        %1308 = vmatpush1.bf16.msra.mxu0 0
        %1309 = vmatprep.subr.bf16.mxu0 0
        %1310 = vmatpush1.bf16.msra.mxu0 0
        %1311 = vmatprep.subr.bf16.mxu0 0
        %1312 = vmatpush1.bf16.msra.mxu0 0
        %1313 = vmatprep.subr.bf16.mxu0 0
        %1314 = vmatpush1.bf16.msra.mxu0 0
        %1315 = vmatprep.subr.bf16.mxu0 0
        %1316 = vmatpush1.bf16.msra.mxu0 0
        %1317 = vmatprep.subr.bf16.mxu0 0
        %1318 = vmatpush1.bf16.msra.mxu0 0
        %1319 = vmatprep.mubr.bf16.mxu0 0
        %1320 = vmatmul.mubr.bf16.gmra.mrb[0].mxu0 %v1276
        %v1321 = vpop.f32.mrb[0].mxu0
        %v1322 = vadd.f32 0.0, %v1321
        %v1323 = vpop.f32.mrb[0].mxu0
        %v1324 = vpop.f32.mrb[0].mxu0
        %v1325 = vadd.f32 0.0, %v1324
        %v1326 = vpop.f32.mrb[0].mxu0
        %1327 = vmatprep.mubr.bf16.mxu0 0
        %1328 = vmatmul.mubr.bf16.gmra.mrb[0].mxu0 %v1279
        %v1329 = vpop.f32.mrb[0].mxu0
        %v1330 = vadd.f32 0.0, %v1329
        %v1331 = vpop.f32.mrb[0].mxu0
        %v1332 = vpop.f32.mrb[0].mxu0
        %v1333 = vadd.f32 0.0, %v1332
        %v1334 = vpop.f32.mrb[0].mxu0
        %1335 = vmatprep.mubr.bf16.mxu0 0
        %1336 = vmatmul.mubr.bf16.gmra.mrb[0].mxu0 %v1282
        %v1337 = vpop.f32.mrb[0].mxu0
        %v1338 = vadd.f32 0.0, %v1337
        %v1339 = vpop.f32.mrb[0].mxu0
        %v1340 = vpop.f32.mrb[0].mxu0
        %v1341 = vadd.f32 0.0, %v1340
        %v1342 = vpop.f32.mrb[0].mxu0
        %1343 = vmatprep.mubr.bf16.mxu0 0
        %1344 = vmatmul.mubr.bf16.gmra.mrb[0].mxu0 %v1285
        %v1345 = vpop.f32.mrb[0].mxu0
        %v1346 = vadd.f32 0.0, %v1345
        %v1347 = vpop.f32.mrb[0].mxu0
        %v1348 = vpop.f32.mrb[0].mxu0
        %v1349 = vadd.f32 0.0, %v1348
        %v1350 = vpop.f32.mrb[0].mxu0
        %1351 = vdwg.mxu0
        %v1352 = vadd.f32 %v1243, %v1322
        %v1353 = vadd.f32 %v1244, %v1325
        %v1354 = vadd.f32 %v1245, %v1330
        %v1355 = vadd.f32 %v1246, %v1333
        %v1356 = vadd.f32 %v1247, %v1338
        %v1357 = vadd.f32 %v1248, %v1341
        %v1358 = vadd.f32 %v1249, %v1346
        %v1359 = vadd.f32 %v1250, %v1349
        %v1361 = vshrl.u32 %v1080, 16
        %v1363 = vshll.u32 %v1080, 16
        %v1365 = vrot.slane %v1363, 1
        %v1366 = vor.u32 %v1361, %v1365
        %v1368 = vshll.u32 %v1081, 16
        %v1370 = vrot.slane %v1368, 1
        %v1371 = vsel %vm1044, %v1366, %v1370
        %v1372 = vshrl.u32 %v1081, 16
        %v1374 = vor.u32 %v1372, %v1370
        %v1376 = vshll.u32 %v1082, 16
        %v1378 = vrot.slane %v1376, 1
        %v1379 = vsel %vm1044, %v1374, %v1378
        %v1380 = vshrl.u32 %v1082, 16
        %v1382 = vor.u32 %v1380, %v1378
        %v1384 = vshll.u32 %v1083, 16
        %v1386 = vrot.slane %v1384, 1
        %v1387 = vsel %vm1044, %v1382, %v1386
        %v1388 = vshrl.u32 %v1083, 16
        %v1390 = vor.u32 %v1388, %v1386
        %v1391 = vrot.slane %v755, 1
        %v1392 = vsel %vm1044, %v1390, %v1391
        %v1401 = vunpack.c.l.b16 %v1101
        %v1402 = vunpack.c.l.b16 %v1102
        %v1403 = vunpack.c.l.b16 %v1103
        %v1404 = vunpack.c.l.b16 %v1104
        %v1405 = vunpack.c.l.b16 %v1105
        %v1406 = vunpack.c.l.b16 %v1106
        %v1407 = vunpack.c.l.b16 %v1107
        %v1408 = vunpack.c.l.b16 %v1108
        %v1409 = vpack.c.b16 %v1402, %v1401
        %v1410 = vpack.c.b16 %v1404, %v1403
        %v1411 = vpack.c.b16 %v1406, %v1405
        %v1412 = vpack.c.b16 %v1408, %v1407
        %v1418 = vsel %vm673, %v1371, 0
        %v1421 = vsel %vm673, %v1379, 0
        %v1424 = vsel %vm673, %v1387, 0
        %v1427 = vsel %vm673, %v1392, 0
        %1429 = vmatprep.subr.bf16.mxu0 0
        %1430 = vmatpush1.bf16.msra.mxu0 %v1409
        %1431 = vmatprep.subr.bf16.mxu0 0
        %1432 = vmatpush1.bf16.msra.mxu0 %v1410
        %1433 = vmatprep.subr.bf16.mxu0 0
        %1434 = vmatpush1.bf16.msra.mxu0 %v1411
        %1435 = vmatprep.subr.bf16.mxu0 0
        %1436 = vmatpush1.bf16.msra.mxu0 %v1412
        %1437 = vmatprep.subr.bf16.mxu0 0
        %1438 = vmatpush1.bf16.msra.mxu0 0
        %1439 = vmatprep.subr.bf16.mxu0 0
        %1440 = vmatpush1.bf16.msra.mxu0 0
        %1441 = vmatprep.subr.bf16.mxu0 0
        %1442 = vmatpush1.bf16.msra.mxu0 0
        %1443 = vmatprep.subr.bf16.mxu0 0
        %1444 = vmatpush1.bf16.msra.mxu0 0
        %1445 = vmatprep.subr.bf16.mxu0 0
        %1446 = vmatpush1.bf16.msra.mxu0 0
        %1447 = vmatprep.subr.bf16.mxu0 0
        %1448 = vmatpush1.bf16.msra.mxu0 0
        %1449 = vmatprep.subr.bf16.mxu0 0
        %1450 = vmatpush1.bf16.msra.mxu0 0
        %1451 = vmatprep.subr.bf16.mxu0 0
        %1452 = vmatpush1.bf16.msra.mxu0 0
        %1453 = vmatprep.subr.bf16.mxu0 0
        %1454 = vmatpush1.bf16.msra.mxu0 0
        %1455 = vmatprep.subr.bf16.mxu0 0
        %1456 = vmatpush1.bf16.msra.mxu0 0
        %1457 = vmatprep.subr.bf16.mxu0 0
        %1458 = vmatpush1.bf16.msra.mxu0 0
        %1459 = vmatprep.subr.bf16.mxu0 0
        %1460 = vmatpush1.bf16.msra.mxu0 0
        %1461 = vmatprep.mubr.bf16.mxu0 0
        %1462 = vmatmul.mubr.bf16.gmra.mrb[0].mxu0 %v1418
        %v1463 = vpop.f32.mrb[0].mxu0
        %v1464 = vadd.f32 0.0, %v1463
        %v1465 = vpop.f32.mrb[0].mxu0
        %v1466 = vpop.f32.mrb[0].mxu0
        %v1467 = vadd.f32 0.0, %v1466
        %v1468 = vpop.f32.mrb[0].mxu0
        %1469 = vmatprep.mubr.bf16.mxu0 0
        %1470 = vmatmul.mubr.bf16.gmra.mrb[0].mxu0 %v1421
        %v1471 = vpop.f32.mrb[0].mxu0
        %v1472 = vadd.f32 0.0, %v1471
        %v1473 = vpop.f32.mrb[0].mxu0
        %v1474 = vpop.f32.mrb[0].mxu0
        %v1475 = vadd.f32 0.0, %v1474
        %v1476 = vpop.f32.mrb[0].mxu0
        %1477 = vmatprep.mubr.bf16.mxu0 0
        %1478 = vmatmul.mubr.bf16.gmra.mrb[0].mxu0 %v1424
        %v1479 = vpop.f32.mrb[0].mxu0
        %v1480 = vadd.f32 0.0, %v1479
        %v1481 = vpop.f32.mrb[0].mxu0
        %v1482 = vpop.f32.mrb[0].mxu0
        %v1483 = vadd.f32 0.0, %v1482
        %v1484 = vpop.f32.mrb[0].mxu0
        %1485 = vmatprep.mubr.bf16.mxu0 0
        %1486 = vmatmul.mubr.bf16.gmra.mrb[0].mxu0 %v1427
        %v1487 = vpop.f32.mrb[0].mxu0
        %v1488 = vadd.f32 0.0, %v1487
        %v1489 = vpop.f32.mrb[0].mxu0
        %v1490 = vpop.f32.mrb[0].mxu0
        %v1491 = vadd.f32 0.0, %v1490
        %v1492 = vpop.f32.mrb[0].mxu0
        %1493 = vdwg.mxu0
        %v1494 = vadd.f32 %v1352, %v1464
        %v1495 = vadd.f32 %v1353, %v1467
        %v1496 = vadd.f32 %v1354, %v1472
        %v1497 = vadd.f32 %v1355, %v1475
        %v1498 = vadd.f32 %v1356, %v1480
        %v1499 = vadd.f32 %v1357, %v1483
        %v1500 = vadd.f32 %v1358, %v1488
        %v1501 = vadd.f32 %v1359, %v1491
        %vm1502 = vcmp.ne.s16.totalorder %v490, 0
        %v1503 = vsel %vm1502, %v430, 0
        %v1504 = vsel %vm518, %v431, 0
        %v1505 = vsel %vm519, %v432, 0
        %v1506 = vsel %vm520, %v433, 0
        %vm1507 = vcmp.ne.s16.totalorder %v578, 0
        %v1508 = vsel %vm1507, %v430, 0
        %v1509 = vsel %vm606, %v431, 0
        %v1510 = vsel %vm607, %v432, 0
        %v1511 = vsel %vm608, %v433, 0
        %s1512 = scalar_lea.vmem [#allocation2], 192
        %v1513 = vld [vmem:[%s1512] sm:$0xf]
        %v1514 = vld [vmem:[%s1512 + $0x4] sm:$0xf]
        %v1515 = vld [vmem:[%s1512 + $0x8] sm:$0xf]
        %v1516 = vld [vmem:[%s1512 + $0xc] sm:$0xf]
        %v1517 = vld [vmem:[%s1512 + $0x10] sm:$0xf]
        %v1518 = vld [vmem:[%s1512 + $0x14] sm:$0xf]
        %v1519 = vld [vmem:[%s1512 + $0x18] sm:$0xf]
        %v1520 = vld [vmem:[%s1512 + $0x1c] sm:$0xf]
        %v1521 = vld [vmem:[%s1512 + $0x20] sm:$0xf]
        %v1522 = vld [vmem:[%s1512 + $0x24] sm:$0xf]
        %v1523 = vld [vmem:[%s1512 + $0x28] sm:$0xf]
        %v1524 = vld [vmem:[%s1512 + $0x2c] sm:$0xf]
        %v1525 = vld [vmem:[%s1512 + $0x30] sm:$0xf]
        %v1526 = vld [vmem:[%s1512 + $0x34] sm:$0xf]
        %v1527 = vld [vmem:[%s1512 + $0x38] sm:$0xf]
        %v1528 = vld [vmem:[%s1512 + $0x3c] sm:$0xf]
        %v1529 = vld [vmem:[%s1512 + $0x40] sm:$0xf]
        %v1530 = vld [vmem:[%s1512 + $0x44] sm:$0xf]
        %v1531 = vld [vmem:[%s1512 + $0x48] sm:$0xf]
        %v1532 = vld [vmem:[%s1512 + $0x4c] sm:$0xf]
        %v1533 = vld [vmem:[%s1512 + $0x50] sm:$0xf]
        %v1534 = vld [vmem:[%s1512 + $0x54] sm:$0xf]
        %v1535 = vld [vmem:[%s1512 + $0x58] sm:$0xf]
        %v1536 = vld [vmem:[%s1512 + $0x5c] sm:$0xf]
        %v1538 = vshrl.u32 %v1503, 16
        %v1540 = vrot.slane %v1538, 3
        %v1541 = vshll.u32 %v1503, 16
        %v1543 = vrot.slane %v1541, 4
        %v1544 = vor.u32 %v1540, %v1543
        %v1546 = vshrl.u32 %v1504, 16
        %v1548 = vrot.slane %v1546, 3
        %v1549 = vshll.u32 %v1504, 16
        %v1551 = vrot.slane %v1549, 4
        %v1552 = vor.u32 %v1548, %v1551
        %v1553 = vsel %vm570, %v1544, %v1552
        %v1555 = vshrl.u32 %v1505, 16
        %v1557 = vrot.slane %v1555, 3
        %v1558 = vshll.u32 %v1505, 16
        %v1560 = vrot.slane %v1558, 4
        %v1561 = vor.u32 %v1557, %v1560
        %v1562 = vsel %vm570, %v1552, %v1561
        %v1564 = vshrl.u32 %v1506, 16
        %v1566 = vrot.slane %v1564, 3
        %v1567 = vshll.u32 %v1506, 16
        %v1569 = vrot.slane %v1567, 4
        %v1570 = vor.u32 %v1566, %v1569
        %v1571 = vsel %vm570, %v1561, %v1570
        %v1572 = vsel %vm570, %v1570, %v758
        %v1581 = vunpack.c.l.b16 %v1513
        %v1582 = vunpack.c.l.b16 %v1514
        %v1583 = vunpack.c.l.b16 %v1515
        %v1584 = vunpack.c.l.b16 %v1516
        %v1585 = vunpack.c.l.b16 %v1517
        %v1586 = vunpack.c.l.b16 %v1518
        %v1587 = vunpack.c.l.b16 %v1519
        %v1588 = vunpack.c.l.b16 %v1520
        %v1589 = vpack.c.b16 %v1582, %v1581
        %v1590 = vpack.c.b16 %v1584, %v1583
        %v1591 = vpack.c.b16 %v1586, %v1585
        %v1592 = vpack.c.b16 %v1588, %v1587
        %v1598 = vsel %vm673, %v1553, 0
        %v1601 = vsel %vm673, %v1562, 0
        %v1604 = vsel %vm673, %v1571, 0
        %v1607 = vsel %vm673, %v1572, 0
        %1609 = vmatprep.subr.bf16.mxu0 0
        %1610 = vmatpush1.bf16.msra.mxu0 %v1589
        %1611 = vmatprep.subr.bf16.mxu0 0
        %1612 = vmatpush1.bf16.msra.mxu0 %v1590
        %1613 = vmatprep.subr.bf16.mxu0 0
        %1614 = vmatpush1.bf16.msra.mxu0 %v1591
        %1615 = vmatprep.subr.bf16.mxu0 0
        %1616 = vmatpush1.bf16.msra.mxu0 %v1592
        %1617 = vmatprep.subr.bf16.mxu0 0
        %1618 = vmatpush1.bf16.msra.mxu0 0
        %1619 = vmatprep.subr.bf16.mxu0 0
        %1620 = vmatpush1.bf16.msra.mxu0 0
        %1621 = vmatprep.subr.bf16.mxu0 0
        %1622 = vmatpush1.bf16.msra.mxu0 0
        %1623 = vmatprep.subr.bf16.mxu0 0
        %1624 = vmatpush1.bf16.msra.mxu0 0
        %1625 = vmatprep.subr.bf16.mxu0 0
        %1626 = vmatpush1.bf16.msra.mxu0 0
        %1627 = vmatprep.subr.bf16.mxu0 0
        %1628 = vmatpush1.bf16.msra.mxu0 0
        %1629 = vmatprep.subr.bf16.mxu0 0
        %1630 = vmatpush1.bf16.msra.mxu0 0
        %1631 = vmatprep.subr.bf16.mxu0 0
        %1632 = vmatpush1.bf16.msra.mxu0 0
        %1633 = vmatprep.subr.bf16.mxu0 0
        %1634 = vmatpush1.bf16.msra.mxu0 0
        %1635 = vmatprep.subr.bf16.mxu0 0
        %1636 = vmatpush1.bf16.msra.mxu0 0
        %1637 = vmatprep.subr.bf16.mxu0 0
        %1638 = vmatpush1.bf16.msra.mxu0 0
        %1639 = vmatprep.subr.bf16.mxu0 0
        %1640 = vmatpush1.bf16.msra.mxu0 0
        %1641 = vmatprep.mubr.bf16.mxu0 0
        %1642 = vmatmul.mubr.bf16.gmra.mrb[0].mxu0 %v1598
        %v1643 = vpop.f32.mrb[0].mxu0
        %v1644 = vadd.f32 0.0, %v1643
        %v1645 = vpop.f32.mrb[0].mxu0
        %v1646 = vpop.f32.mrb[0].mxu0
        %v1647 = vadd.f32 0.0, %v1646
        %v1648 = vpop.f32.mrb[0].mxu0
        %1649 = vmatprep.mubr.bf16.mxu0 0
        %1650 = vmatmul.mubr.bf16.gmra.mrb[0].mxu0 %v1601
        %v1651 = vpop.f32.mrb[0].mxu0
        %v1652 = vadd.f32 0.0, %v1651
        %v1653 = vpop.f32.mrb[0].mxu0
        %v1654 = vpop.f32.mrb[0].mxu0
        %v1655 = vadd.f32 0.0, %v1654
        %v1656 = vpop.f32.mrb[0].mxu0
        %1657 = vmatprep.mubr.bf16.mxu0 0
        %1658 = vmatmul.mubr.bf16.gmra.mrb[0].mxu0 %v1604
        %v1659 = vpop.f32.mrb[0].mxu0
        %v1660 = vadd.f32 0.0, %v1659
        %v1661 = vpop.f32.mrb[0].mxu0
        %v1662 = vpop.f32.mrb[0].mxu0
        %v1663 = vadd.f32 0.0, %v1662
        %v1664 = vpop.f32.mrb[0].mxu0
        %1665 = vmatprep.mubr.bf16.mxu0 0
        %1666 = vmatmul.mubr.bf16.gmra.mrb[0].mxu0 %v1607
        %v1667 = vpop.f32.mrb[0].mxu0
        %v1668 = vadd.f32 0.0, %v1667
        %v1669 = vpop.f32.mrb[0].mxu0
        %v1670 = vpop.f32.mrb[0].mxu0
        %v1671 = vadd.f32 0.0, %v1670
        %v1672 = vpop.f32.mrb[0].mxu0
        %1673 = vdwg.mxu0
        %v1674 = vadd.f32 %v1494, %v1644
        %v1675 = vadd.f32 %v1495, %v1647
        %v1676 = vadd.f32 %v1496, %v1652
        %v1677 = vadd.f32 %v1497, %v1655
        %v1678 = vadd.f32 %v1498, %v1660
        %v1679 = vadd.f32 %v1499, %v1663
        %v1680 = vadd.f32 %v1500, %v1668
        %v1681 = vadd.f32 %v1501, %v1671
        %v1682 = vsel %vm639, %v647, %v640
        %v1691 = vunpack.c.l.b16 %v1521
        %v1692 = vunpack.c.l.b16 %v1522
        %v1693 = vunpack.c.l.b16 %v1523
        %v1694 = vunpack.c.l.b16 %v1524
        %v1695 = vunpack.c.l.b16 %v1525
        %v1696 = vunpack.c.l.b16 %v1526
        %v1697 = vunpack.c.l.b16 %v1527
        %v1698 = vunpack.c.l.b16 %v1528
        %v1699 = vpack.c.b16 %v1692, %v1691
        %v1700 = vpack.c.b16 %v1694, %v1693
        %v1701 = vpack.c.b16 %v1696, %v1695
        %v1702 = vpack.c.b16 %v1698, %v1697
        %v1708 = vsel %vm673, %v1682, 0
        %1710 = vmatprep.subr.bf16.mxu0 0
        %1711 = vmatpush1.bf16.msra.mxu0 %v1699
        %1712 = vmatprep.subr.bf16.mxu0 0
        %1713 = vmatpush1.bf16.msra.mxu0 %v1700
        %1714 = vmatprep.subr.bf16.mxu0 0
        %1715 = vmatpush1.bf16.msra.mxu0 %v1701
        %1716 = vmatprep.subr.bf16.mxu0 0
        %1717 = vmatpush1.bf16.msra.mxu0 %v1702
        %1718 = vmatprep.subr.bf16.mxu0 0
        %1719 = vmatpush1.bf16.msra.mxu0 0
        %1720 = vmatprep.subr.bf16.mxu0 0
        %1721 = vmatpush1.bf16.msra.mxu0 0
        %1722 = vmatprep.subr.bf16.mxu0 0
        %1723 = vmatpush1.bf16.msra.mxu0 0
        %1724 = vmatprep.subr.bf16.mxu0 0
        %1725 = vmatpush1.bf16.msra.mxu0 0
        %1726 = vmatprep.subr.bf16.mxu0 0
        %1727 = vmatpush1.bf16.msra.mxu0 0
        %1728 = vmatprep.subr.bf16.mxu0 0
        %1729 = vmatpush1.bf16.msra.mxu0 0
        %1730 = vmatprep.subr.bf16.mxu0 0
        %1731 = vmatpush1.bf16.msra.mxu0 0
        %1732 = vmatprep.subr.bf16.mxu0 0
        %1733 = vmatpush1.bf16.msra.mxu0 0
        %1734 = vmatprep.subr.bf16.mxu0 0
        %1735 = vmatpush1.bf16.msra.mxu0 0
        %1736 = vmatprep.subr.bf16.mxu0 0
        %1737 = vmatpush1.bf16.msra.mxu0 0
        %1738 = vmatprep.subr.bf16.mxu0 0
        %1739 = vmatpush1.bf16.msra.mxu0 0
        %1740 = vmatprep.subr.bf16.mxu0 0
        %1741 = vmatpush1.bf16.msra.mxu0 0
        %1742 = vmatprep.mubr.bf16.mxu0 0
        %1743 = vmatmul.mubr.bf16.gmra.mrb[0].mxu0 %v678
        %v1744 = vpop.f32.mrb[0].mxu0
        %v1745 = vadd.f32 0.0, %v1744
        %v1746 = vpop.f32.mrb[0].mxu0
        %v1747 = vpop.f32.mrb[0].mxu0
        %v1748 = vadd.f32 0.0, %v1747
        %v1749 = vpop.f32.mrb[0].mxu0
        %1750 = vmatprep.mubr.bf16.mxu0 0
        %1751 = vmatmul.mubr.bf16.gmra.mrb[0].mxu0 %v681
        %v1752 = vpop.f32.mrb[0].mxu0
        %v1753 = vadd.f32 0.0, %v1752
        %v1754 = vpop.f32.mrb[0].mxu0
        %v1755 = vpop.f32.mrb[0].mxu0
        %v1756 = vadd.f32 0.0, %v1755
        %v1757 = vpop.f32.mrb[0].mxu0
        %1758 = vmatprep.mubr.bf16.mxu0 0
        %1759 = vmatmul.mubr.bf16.gmra.mrb[0].mxu0 %v684
        %v1760 = vpop.f32.mrb[0].mxu0
        %v1761 = vadd.f32 0.0, %v1760
        %v1762 = vpop.f32.mrb[0].mxu0
        %v1763 = vpop.f32.mrb[0].mxu0
        %v1764 = vadd.f32 0.0, %v1763
        %v1765 = vpop.f32.mrb[0].mxu0
        %1766 = vmatprep.mubr.bf16.mxu0 0
        %1767 = vmatmul.mubr.bf16.gmra.mrb[0].mxu0 %v1708
        %v1768 = vpop.f32.mrb[0].mxu0
        %v1769 = vadd.f32 0.0, %v1768
        %v1770 = vpop.f32.mrb[0].mxu0
        %v1771 = vpop.f32.mrb[0].mxu0
        %v1772 = vadd.f32 0.0, %v1771
        %v1773 = vpop.f32.mrb[0].mxu0
        %1774 = vdwg.mxu0
        %v1775 = vadd.f32 %v1674, %v1745
        %v1776 = vadd.f32 %v1675, %v1748
        %v1777 = vadd.f32 %v1676, %v1753
        %v1778 = vadd.f32 %v1677, %v1756
        %v1779 = vadd.f32 %v1678, %v1761
        %v1780 = vadd.f32 %v1679, %v1764
        %v1781 = vadd.f32 %v1680, %v1769
        %v1782 = vadd.f32 %v1681, %v1772
        %v1784 = vshrl.u32 %v1508, 16
        %v1786 = vrot.slane %v1784, 4
        %v1787 = vshll.u32 %v1508, 16
        %v1789 = vrot.slane %v1787, 5
        %v1790 = vor.u32 %v1786, %v1789
        %v1792 = vshrl.u32 %v1509, 16
        %v1794 = vrot.slane %v1792, 4
        %v1795 = vshll.u32 %v1509, 16
        %v1797 = vrot.slane %v1795, 5
        %v1798 = vor.u32 %v1794, %v1797
        %v1799 = vsel %vm482, %v1790, %v1798
        %v1801 = vshrl.u32 %v1510, 16
        %v1803 = vrot.slane %v1801, 4
        %v1804 = vshll.u32 %v1510, 16
        %v1806 = vrot.slane %v1804, 5
        %v1807 = vor.u32 %v1803, %v1806
        %v1808 = vsel %vm482, %v1798, %v1807
        %v1810 = vshrl.u32 %v1511, 16
        %v1812 = vrot.slane %v1810, 4
        %v1813 = vshll.u32 %v1511, 16
        %v1815 = vrot.slane %v1813, 5
        %v1816 = vor.u32 %v1812, %v1815
        %v1817 = vsel %vm482, %v1807, %v1816
        %v1818 = vsel %vm482, %v1816, %v898
        %v1827 = vunpack.c.l.b16 %v1529
        %v1828 = vunpack.c.l.b16 %v1530
        %v1829 = vunpack.c.l.b16 %v1531
        %v1830 = vunpack.c.l.b16 %v1532
        %v1831 = vunpack.c.l.b16 %v1533
        %v1832 = vunpack.c.l.b16 %v1534
        %v1833 = vunpack.c.l.b16 %v1535
        %v1834 = vunpack.c.l.b16 %v1536
        %v1835 = vpack.c.b16 %v1828, %v1827
        %v1836 = vpack.c.b16 %v1830, %v1829
        %v1837 = vpack.c.b16 %v1832, %v1831
        %v1838 = vpack.c.b16 %v1834, %v1833
        %v1844 = vsel %vm673, %v1799, 0
        %v1847 = vsel %vm673, %v1808, 0
        %v1850 = vsel %vm673, %v1817, 0
        %v1853 = vsel %vm673, %v1818, 0
        %1855 = vmatprep.subr.bf16.mxu0 0
        %1856 = vmatpush1.bf16.msra.mxu0 %v1835
        %1857 = vmatprep.subr.bf16.mxu0 0
        %1858 = vmatpush1.bf16.msra.mxu0 %v1836
        %1859 = vmatprep.subr.bf16.mxu0 0
        %1860 = vmatpush1.bf16.msra.mxu0 %v1837
        %1861 = vmatprep.subr.bf16.mxu0 0
        %1862 = vmatpush1.bf16.msra.mxu0 %v1838
        %1863 = vmatprep.subr.bf16.mxu0 0
        %1864 = vmatpush1.bf16.msra.mxu0 0
        %1865 = vmatprep.subr.bf16.mxu0 0
        %1866 = vmatpush1.bf16.msra.mxu0 0
        %1867 = vmatprep.subr.bf16.mxu0 0
        %1868 = vmatpush1.bf16.msra.mxu0 0
        %1869 = vmatprep.subr.bf16.mxu0 0
        %1870 = vmatpush1.bf16.msra.mxu0 0
        %1871 = vmatprep.subr.bf16.mxu0 0
        %1872 = vmatpush1.bf16.msra.mxu0 0
        %1873 = vmatprep.subr.bf16.mxu0 0
        %1874 = vmatpush1.bf16.msra.mxu0 0
        %1875 = vmatprep.subr.bf16.mxu0 0
        %1876 = vmatpush1.bf16.msra.mxu0 0
        %1877 = vmatprep.subr.bf16.mxu0 0
        %1878 = vmatpush1.bf16.msra.mxu0 0
        %1879 = vmatprep.subr.bf16.mxu0 0
        %1880 = vmatpush1.bf16.msra.mxu0 0
        %1881 = vmatprep.subr.bf16.mxu0 0
        %1882 = vmatpush1.bf16.msra.mxu0 0
        %1883 = vmatprep.subr.bf16.mxu0 0
        %1884 = vmatpush1.bf16.msra.mxu0 0
        %1885 = vmatprep.subr.bf16.mxu0 0
        %1886 = vmatpush1.bf16.msra.mxu0 0
        %1887 = vmatprep.mubr.bf16.mxu0 0
        %1888 = vmatmul.mubr.bf16.gmra.mrb[0].mxu0 %v1844
        %v1889 = vpop.f32.mrb[0].mxu0
        %v1890 = vadd.f32 0.0, %v1889
        %v1891 = vpop.f32.mrb[0].mxu0
        %v1892 = vpop.f32.mrb[0].mxu0
        %v1893 = vadd.f32 0.0, %v1892
        %v1894 = vpop.f32.mrb[0].mxu0
        %1895 = vmatprep.mubr.bf16.mxu0 0
        %1896 = vmatmul.mubr.bf16.gmra.mrb[0].mxu0 %v1847
        %v1897 = vpop.f32.mrb[0].mxu0
        %v1898 = vadd.f32 0.0, %v1897
        %v1899 = vpop.f32.mrb[0].mxu0
        %v1900 = vpop.f32.mrb[0].mxu0
        %v1901 = vadd.f32 0.0, %v1900
        %v1902 = vpop.f32.mrb[0].mxu0
        %1903 = vmatprep.mubr.bf16.mxu0 0
        %1904 = vmatmul.mubr.bf16.gmra.mrb[0].mxu0 %v1850
        %v1905 = vpop.f32.mrb[0].mxu0
        %v1906 = vadd.f32 0.0, %v1905
        %v1907 = vpop.f32.mrb[0].mxu0
        %v1908 = vpop.f32.mrb[0].mxu0
        %v1909 = vadd.f32 0.0, %v1908
        %v1910 = vpop.f32.mrb[0].mxu0
        %1911 = vmatprep.mubr.bf16.mxu0 0
        %1912 = vmatmul.mubr.bf16.gmra.mrb[0].mxu0 %v1853
        %v1913 = vpop.f32.mrb[0].mxu0
        %v1914 = vadd.f32 0.0, %v1913
        %v1915 = vpop.f32.mrb[0].mxu0
        %v1916 = vpop.f32.mrb[0].mxu0
        %v1917 = vadd.f32 0.0, %v1916
        %v1918 = vpop.f32.mrb[0].mxu0
        %1919 = vdwg.mxu0
        %v1920 = vadd.f32 %v1775, %v1890
        %v1921 = vadd.f32 %v1776, %v1893
        %v1922 = vadd.f32 %v1777, %v1898
        %v1923 = vadd.f32 %v1778, %v1901
        %v1924 = vadd.f32 %v1779, %v1906
        %v1925 = vadd.f32 %v1780, %v1909
        %v1926 = vadd.f32 %v1781, %v1914
        %v1927 = vadd.f32 %v1782, %v1917
        %v1928 = vld [vmem:[%s271] sm:$0x1]
        %v1930 = vlaneseq
        %v1931 = vshrl.u32 %v1930, 7
        %v1932 = vsub.s32 0, %v1931
        %v1933 = vrot.slane %v1928, %v1932
        %v1935 = vadd.f32 %v1920, %v1933
        %v1936 = vadd.f32 %v1921, %v1933
        %v1937 = vadd.f32 %v1922, %v1933
        %v1938 = vadd.f32 %v1923, %v1933
        %v1939 = vadd.f32 %v1924, %v1933
        %v1940 = vadd.f32 %v1925, %v1933
        %v1941 = vadd.f32 %v1926, %v1933
        %v1942 = vadd.f32 %v1927, %v1933
        %v1943 = vld [vmem:[%s279] sm:$0xf]
        %v1944 = vld [vmem:[%s279 + $0x4] sm:$0xf]
        %v1945 = vld [vmem:[%s279 + $0x8] sm:$0xf]
        %v1946 = vld [vmem:[%s279 + $0xc] sm:$0xf]
        %v1947 = vld [vmem:[%s279 + $0x10] sm:$0xf]
        %v1948 = vld [vmem:[%s279 + $0x14] sm:$0xf]
        %v1949 = vld [vmem:[%s279 + $0x18] sm:$0xf]
        %v1950 = vld [vmem:[%s279 + $0x1c] sm:$0xf]
        %v1951 = vunpack.c.l.bf16 %v1943
        %v1952 = vunpack.c.l.bf16 %v1944
        %v1953 = vunpack.c.l.bf16 %v1945
        %v1954 = vunpack.c.l.bf16 %v1946
        %v1955 = vunpack.c.l.bf16 %v1947
        %v1956 = vunpack.c.l.bf16 %v1948
        %v1957 = vunpack.c.l.bf16 %v1949
        %v1958 = vunpack.c.l.bf16 %v1950
        %v1959 = vadd.f32 %v1935, %v1951
        %v1960 = vadd.f32 %v1936, %v1952
        %v1961 = vadd.f32 %v1937, %v1953
        %v1962 = vadd.f32 %v1938, %v1954
        %v1963 = vadd.f32 %v1939, %v1955
        %v1964 = vadd.f32 %v1940, %v1956
        %v1965 = vadd.f32 %v1941, %v1957
        %v1966 = vadd.f32 %v1942, %v1958
        %v1967 = vmax.f32 %v1959, 0.0
        %v1968 = vmax.f32 %v1960, 0.0
        %v1969 = vmax.f32 %v1961, 0.0
        %v1970 = vmax.f32 %v1962, 0.0
        %v1971 = vmax.f32 %v1963, 0.0
        %v1972 = vmax.f32 %v1964, 0.0
        %v1973 = vmax.f32 %v1965, 0.0
        %v1974 = vmax.f32 %v1966, 0.0
        %v1975 = vpack.c.bf16 %v1968, %v1967
        %v1976 = vpack.c.bf16 %v1970, %v1969
        %v1977 = vpack.c.bf16 %v1972, %v1971
        %v1978 = vpack.c.bf16 %v1974, %v1973
        %v1983 = vunpack.c.l.b16 %v1975
        %v1984 = vunpack.c.h.b16 %v1975
        %v1985 = vunpack.c.l.b16 %v1976
        %v1986 = vunpack.c.h.b16 %v1976
        %v1987 = vunpack.c.l.b16 %v1977
        %v1988 = vunpack.c.h.b16 %v1977
        %v1989 = vunpack.c.l.b16 %v1978
        %v1990 = vunpack.c.h.b16 %v1978
        %v1991 = vpack.c.b16 %v1983, %v1983
        %v1992 = vpack.c.b16 %v1984, %v1984
        %v1993 = vpack.c.b16 %v1985, %v1985
        %v1994 = vpack.c.b16 %v1986, %v1986
        %v1995 = vpack.c.b16 %v1987, %v1987
        %v1996 = vpack.c.b16 %v1988, %v1988
        %v1997 = vpack.c.b16 %v1989, %v1989
        %v1998 = vpack.c.b16 %v1990, %v1990
        %2007 = vst [vmem:[%s262] sm:$0xf] %v1991
        %2008 = vst [vmem:[%s262 + $0x4] sm:$0xf] %v1992
        %2009 = vst [vmem:[%s262 + $0x8] sm:$0xf] %v1993
        %2010 = vst [vmem:[%s262 + $0xc] sm:$0xf] %v1994
        %2011 = vst [vmem:[%s262 + $0x10] sm:$0xf] %v1995
        %2012 = vst [vmem:[%s262 + $0x14] sm:$0xf] %v1996
        %2013 = vst [vmem:[%s262 + $0x18] sm:$0xf] %v1997
        %2014 = vst [vmem:[%s262 + $0x1c] sm:$0xf] %v1998
        %s2015 = sand.u32 %s147, 1
        %s2016 = scalar_lea.sflag [#allocation4], %s2015
        %s2017 = sand.u32 %s147, 1
        %s2018 = smul.addr %s2017, 32
        %s2019 = scalar_lea.vmem [#allocation5], %s2018
        // Predicated region
        $region41: #{tpu_custom_call.1} parent=35 // pred_check
          %p2020 = pneg %p157
        $region42: #{tpu_custom_call.1} parent=35 // pred_check_branch
          %2022 = sbr.rel (%p2020) target = $region44
        $region43: #{tpu_custom_call.1} parent=35 // pred_region
          %s2023 = smul.u32 8, %s23
          %s2025 = ssub.s32 512, 512
          %2026 = vsyncadd %s2016, %s2025
          %s2027 = sadd.s32 %s24, %s2023
          %s2028 = smul.addr %s2027, 64
          %s2029 = scalar_lea.hbm %s4, %s2028
          %s2030 = sshll.u32 %s2019, 4
          %s2031 = int_to_ptr.vmem [resolvable:$true] %s2030
          %2036 = dma.vmem_to_hbm [thread:$0]  %s2031, 512, %s2029, %s2016, 64, 64, 4
        $region44: #{tpu_custom_call.1} parent=35 // pred_fallthru
          _
      $region36: #{tpu_custom_call.1} parent=5 // pred_fallthru
        _
      %p2037 = scmp.le.s32.totalorder 2, %s14
      // Predicated region
      $region45: #{tpu_custom_call.1} parent=5 // pred_check
        %p2038 = pneg %p2037
      $region46: #{tpu_custom_call.1} parent=5 // pred_check_branch
        %2040 = sbr.rel (%p2038) target = $region48
      $region47: #{tpu_custom_call.1} parent=5 // pred_region
        %s2041 = ssub.s32 %s14, 2
        // Predicated region
        $region49: #{tpu_custom_call.1} parent=47 // pred_check
          %p2042 = pneg %p163
        $region50: #{tpu_custom_call.1} parent=47 // pred_check_branch
          %2044 = sbr.rel (%p2042) target = $region52
        $region51: #{tpu_custom_call.1} parent=47 // pred_region
          %s2045 = sand.u32 %s148, 1
          %s2046 = scalar_lea.sflag [#allocation4], %s2045
          %s2047 = sand.u32 %s148, 1
          %s2048 = smul.addr %s2047, 32
          %s2049 = scalar_lea.vmem [#allocation5], %s2048
          %2050 = dma.done %s2046, 512
        $region52: #{tpu_custom_call.1} parent=47 // pred_fallthru
          _
      $region48: #{tpu_custom_call.1} parent=5 // pred_fallthru
        _
    $region6: #{tpu_custom_call.1} parent=1 // loop_footer
      %s18 = sadd.s32 1, %s14
    $region7: #{tpu_custom_call.1} parent=1 // loop_footer_branch
      %13 = sbr.rel target = $region3
    $region8: #{tpu_custom_call.1} parent=1 // loop_exit
      _
    %2051 = vsyncpa [#allocation3], 1
    %s2052 = scalar_lea.sflag [#allocation3], 1
    %2053 = vsyncpa %s2052, 1
    %2054 = vsyncpa [#allocation4], 1
    %s2055 = scalar_lea.sflag [#allocation4], 1
    %2056 = vsyncpa %s2055, 1

</llo_original>
